<compile_context>
chip_gen: v7x
topology: tpu7x:2x2x1
jax: 0.10.0
libtpu: 0.0.40
codegen_flags: <defaults>
</compile_context>

<pallas_src>
import math

import jax
import jax.numpy as jnp
from jax import lax
from jax.experimental import pallas as pl
from jax.experimental.pallas import tpu as pltpu

EPS = 1e-5
MM_DTYPE = jnp.bfloat16        # MXU operands + stored intermediates; stats/affine in f32


# ----------------------------------------------------------------------------- helpers
def _round_up(x, m):
    return ((x + m - 1) // m) * m


def _lane_pad(c):
    """Pad a channel count to a multiple of 128 when that at most doubles it."""
    if c % 128 == 0:
        return c
    p = _round_up(c, 128)
    return p if 2 * c >= p else c


def _pad_last(a, cp):
    c = a.shape[-1]
    if c == cp:
        return a
    return jnp.pad(a, [(0, 0)] * (a.ndim - 1) + [(0, cp - c)])


def _hw_budget():
    """(vmem_limit_bytes, row-tile target) — generous on v5e/v6e, safe elsewhere."""
    try:
        kind = jax.devices()[0].device_kind.lower()
    except Exception:
        kind = ""
    if "v5" in kind or "v6" in kind:          # 128 MiB physical VMEM parts
        return 96 * 1024 * 1024, 2048
    return 48 * 1024 * 1024, 1024             # v7x (64 MiB / TC) and unknown parts


def _pick_tile(m, target):
    """Largest multiple of 8 that divides m and is <= target."""
    t = max(8, min(m, (target // 8) * 8))
    while m % t:
        t -= 8
    return t


def _cparams(vmem_limit, *sems):
    return pltpu.CompilerParams(dimension_semantics=sems, vmem_limit_bytes=vmem_limit)


def _bn_affine(stats, g, b, inv_m):
    """(scale, shift) from a (16, C) per-sublane sum / sumsq accumulator (f32)."""
    ssum = jnp.sum(stats[0:8], axis=0, keepdims=True)
    ssq = jnp.sum(stats[8:16], axis=0, keepdims=True)
    mean = ssum * inv_m
    var = jnp.maximum(ssq * inv_m - mean * mean, 0.0)   # one-pass E[x^2]-mean^2, clamped
    scale = g * lax.rsqrt(var + EPS)
    return scale, b - mean * scale


def _accum_stats(st_ref, h, cp):
    """Accumulate per-channel sum/sumsq of f32 `h` into a zero-initialized (16, cp) ref.

    Lane-aligned case: keep (8, cp) per-sublane partials (pure VPU adds every step; the
    cross-sublane reduce happens once in the wrapper).  Narrow-channel fallback: plain
    axis-0 sums into rows 0 and 8 (remaining rows stay zero, same consumer format).
    """
    if cp % 128 == 0 and h.shape[0] % 8 == 0:
        p = h.reshape(-1, 8, cp)
        st_ref[0:8, :] += jnp.sum(p, axis=0)
        st_ref[8:16, :] += jnp.sum(p * p, axis=0)
    else:
        st_ref[0:1, :] += jnp.sum(h, axis=0, keepdims=True)
        st_ref[8:9, :] += jnp.sum(h * h, axis=0, keepdims=True)


# ------------------------------------------------------------------------------ kernels
def make_stage1_kernel(cbp, mm_dtype):
    """Pass A: BN1 affine + ReLU -> conv1 (1x1, no bias); accumulate BN2 partial stats."""
    def kernel(x_ref, sc1_ref, sh1_ref, w1_ref, h1_ref, st2_ref):
        @pl.when(pl.program_id(0) == 0)
        def _():
            st2_ref[...] = jnp.zeros_like(st2_ref)
        a = jnp.maximum(x_ref[...].astype(jnp.float32) * sc1_ref[...] + sh1_ref[...], 0.0)
        h1 = jnp.dot(a.astype(mm_dtype), w1_ref[...], preferred_element_type=jnp.float32)
        h1_ref[...] = h1.astype(h1_ref.dtype)          # bf16 lane-dense store
        _accum_stats(st2_ref, h1, cbp)                 # stats on the pre-cast f32 value
    return kernel


def make_conv2_kernel(H, W, cbp, pad0, mm_dtype):
    """Pass B (per image): BN2 affine+ReLU -> 3x3 conv (stride 1, pad 1); BN3 stats."""
    HW = H * W

    def kernel(h1_ref, sc2_ref, sh2_ref, w2_ref, notl_ref, notr_ref,
               h2_ref, st3_ref, pad_ref):
        @pl.when(pl.program_id(0) == 0)
        def _():
            st3_ref[...] = jnp.zeros_like(st3_ref)
            # Zero the halo scratch once; halo rows are never written afterwards and the
            # interior is fully overwritten every grid step.
            pad_ref[...] = jnp.zeros_like(pad_ref)

        a = jnp.maximum(h1_ref[...].astype(jnp.float32) * sc2_ref[...] + sh2_ref[...], 0.0)
        pad_ref[pad0:pad0 + HW, :] = a                 # interior of the zero-halo buffer

        # 3x3 conv as 9 accumulated K=Cbp matmuls over shifted flattened windows.
        # Only the +/-1 column taps can wrap within the flattened rows; vertical /
        # cross-image taps land in the zero halo.  Wrap masks are precomputed inputs.
        acc = jnp.zeros((HW, cbp), jnp.float32)
        t = 0
        for oh in (-1, 0, 1):
            for ow in (-1, 0, 1):
                s = oh * W + ow
                win = pad_ref[pad0 + s: pad0 + s + HW, :]
                if ow == -1:
                    win = win * notl_ref[...]
                elif ow == 1:
                    win = win * notr_ref[...]
                acc = acc + jnp.dot(win.astype(mm_dtype), w2_ref[t],
                                    preferred_element_type=jnp.float32)
                t += 1

        h2_ref[...] = acc.astype(h2_ref.dtype)         # bf16 lane-dense store
        _accum_stats(st3_ref, acc, cbp)
    return kernel


def make_output_kernel(has_shortcut, mm_dtype):
    """Pass C: BN3 affine+ReLU -> conv3 (1x1 + bias) + shortcut (projection or identity)."""
    if has_shortcut:
        def kernel(h2_ref, sc3_ref, sh3_ref, w3_ref, b3_ref, x_ref, ws_ref, o_ref):
            a = jnp.maximum(h2_ref[...].astype(jnp.float32) * sc3_ref[...] + sh3_ref[...], 0.0)
            out = jnp.dot(a.astype(mm_dtype), w3_ref[...],
                          preferred_element_type=jnp.float32) + b3_ref[...]
            out = out + jnp.dot(x_ref[...], ws_ref[...],
                                preferred_element_type=jnp.float32)
            o_ref[...] = out
    else:
        def kernel(h2_ref, sc3_ref, sh3_ref, w3_ref, b3_ref, x_ref, o_ref):
            a = jnp.maximum(h2_ref[...].astype(jnp.float32) * sc3_ref[...] + sh3_ref[...], 0.0)
            out = jnp.dot(a.astype(mm_dtype), w3_ref[...],
                          preferred_element_type=jnp.float32) + b3_ref[...]
            o_ref[...] = out + x_ref[...].astype(jnp.float32)   # identity: plain add
    return kernel


# ------------------------------------------------------------------------------ wrapper
def bottleneck_forward(x_nchw, params, stride=1, tile_m=None):
    """Bottleneck forward pass. Input/output are NCHW (PyTorch convention)."""
    assert stride == 1  # TODO(synk): stride>1 not implemented in-kernel.
    N, Cin, H, W = x_nchw.shape
    Cb = params["w1"].shape[1]
    Cout = params["w3"].shape[1]
    M, HW = N * H * W, H * W
    assert M % 8 == 0 and HW % 8 == 0, "row counts must be sublane (8) aligned"
    inv_m = 1.0 / M

    vmem_limit, tile_target = _hw_budget()
    tm = _pick_tile(M, tile_m if tile_m is not None else tile_target)
    nt = M // tm
    Cbp = _lane_pad(Cb)                       # lane-dense bottleneck channel width

    # --- layout glue + BN1 statistics (fused XLA reduce; no standalone stats pass) -----
    xf = jnp.transpose(x_nchw, (0, 2, 3, 1)).reshape(M, Cin).astype(jnp.float32)
    mean1 = jnp.mean(xf, axis=0, keepdims=True)
    var1 = jnp.maximum(jnp.mean(xf * xf, axis=0, keepdims=True) - mean1 * mean1, 0.0)
    scale1 = params["g1"] * lax.rsqrt(var1 + EPS)
    shift1 = params["b1"] - mean1 * scale1
    x2d = xf.astype(MM_DTYPE)                 # bf16 activations in HBM (read by A and C)

    # --- parameters: pad bottleneck channels to Cbp, cast matmul operands to bf16 ------
    w1 = _pad_last(params["w1"], Cbp).astype(MM_DTYPE)                               # (Cin, Cbp)
    w2 = jnp.pad(params["w2"], ((0, 0), (0, Cbp - Cb), (0, Cbp - Cb))).astype(MM_DTYPE)  # (9,Cbp,Cbp)
    w3 = jnp.pad(params["w3"], ((0, Cbp - Cb), (0, 0))).astype(MM_DTYPE)             # (Cbp, Cout)
    g2, b2 = _pad_last(params["g2"], Cbp), _pad_last(params["b2"], Cbp)
    g3, b3 = _pad_last(params["g3"], Cbp), _pad_last(params["b3"], Cbp)
    bias3 = params["bias3"].astype(jnp.float32)
    ws = params.get("ws", None)
    has_shortcut = ws is not None
    if has_shortcut:
        ws = ws.astype(MM_DTYPE)
    else:
        assert Cin == Cout, "identity shortcut requires inplanes == outplanes"

    full = lambda shape: pl.BlockSpec(shape, lambda i, _s=shape: tuple(0 for _ in _s))
    row_tile = lambda c: pl.BlockSpec((tm, c), lambda i: (i, 0))
    img_tile = lambda c: pl.BlockSpec((HW, c), lambda n: (n, 0))

    # --- pass A: BN1+ReLU -> conv1 (1x1), accumulate BN2 partial stats ------------------
    ce_a = pl.CostEstimate(
        flops=int(2 * M * Cin * Cbp + 8 * M * max(Cin, Cbp)),
        transcendentals=0,
        bytes_accessed=int(2 * M * Cin + 2 * M * Cbp + 2 * Cin * Cbp + 64 * Cbp))
    h1, st2 = pl.pallas_call(
        make_stage1_kernel(Cbp, MM_DTYPE),
        grid=(nt,),
        in_specs=[row_tile(Cin), full((1, Cin)), full((1, Cin)), full((Cin, Cbp))],
        out_specs=(row_tile(Cbp), full((16, Cbp))),
        out_shape=(jax.ShapeDtypeStruct((M, Cbp), MM_DTYPE),
                   jax.ShapeDtypeStruct((16, Cbp), jnp.float32)),
        compiler_params=_cparams(vmem_limit, "arbitrary"),
        cost_estimate=ce_a,
    )(x2d, scale1, shift1, w1)
    scale2, shift2 = _bn_affine(st2, g2, b2, inv_m)

    # --- pass B: BN2+ReLU -> conv2 (3x3, pad 1) per image, accumulate BN3 partial stats -
    pad0 = _round_up(W + 1, 8)                 # sublane-aligned halo >= one row + 1
    col = (jnp.arange(HW, dtype=jnp.int32) % W).reshape(HW, 1)
    notl = (col != 0).astype(jnp.float32)      # grid-invariant horizontal-wrap masks
    notr = (col != (W - 1)).astype(jnp.float32)

    ce_b = pl.CostEstimate(
        flops=int(18 * M * Cbp * Cbp + 12 * M * Cbp),
        transcendentals=0,
        bytes_accessed=int(4 * M * Cbp + 18 * Cbp * Cbp + 64 * Cbp))
    h2, st3 = pl.pallas_call(
        make_conv2_kernel(H, W, Cbp, pad0, MM_DTYPE),
        grid=(N,),
        in_specs=[img_tile(Cbp), full((1, Cbp)), full((1, Cbp)), full((9, Cbp, Cbp)),
                  full((HW, 1)), full((HW, 1))],
        out_specs=(img_tile(Cbp), full((16, Cbp))),
        out_shape=(jax.ShapeDtypeStruct((M, Cbp), MM_DTYPE),
                   jax.ShapeDtypeStruct((16, Cbp), jnp.float32)),
        scratch_shapes=[pltpu.VMEM((HW + 2 * pad0, Cbp), jnp.float32)],
        compiler_params=_cparams(vmem_limit, "arbitrary"),
        cost_estimate=ce_b,
    )(h1, scale2, shift2, w2, notl, notr)
    scale3, shift3 = _bn_affine(st3, g3, b3, inv_m)

    # --- pass C: BN3+ReLU -> conv3 (1x1 + bias) + shortcut; fully parallel over tiles ---
    in_specs = [row_tile(Cbp), full((1, Cbp)), full((1, Cbp)),
                full((Cbp, Cout)), full((1, Cout)), row_tile(Cin)]
    args = [h2, scale3, shift3, w3, bias3, x2d]
    flops_c = 2 * M * Cbp * Cout + 6 * M * Cout
    bytes_c = 2 * M * Cbp + 2 * M * Cin + 4 * M * Cout + 2 * Cbp * Cout
    if has_shortcut:
        in_specs.append(full((Cin, Cout)))
        args.append(ws)
        flops_c += 2 * M * Cin * Cout
        bytes_c += 2 * Cin * Cout
    out2d = pl.pallas_call(
        make_output_kernel(has_shortcut, MM_DTYPE),
        grid=(nt,),
        in_specs=in_specs,
        out_specs=row_tile(Cout),
        out_shape=jax.ShapeDtypeStruct((M, Cout), jnp.float32),
        compiler_params=_cparams(vmem_limit, "parallel"),
        cost_estimate=pl.CostEstimate(flops=int(flops_c), transcendentals=0,
                                      bytes_accessed=int(bytes_c)),
    )(*args)

    # glue: (M, Cout) -> NHWC -> NCHW
    return jnp.transpose(out2d.reshape(N, H, W, Cout), (0, 3, 1, 2))


# --------------------------------------------------------------------------- reference
def reference_bottleneck(x_nchw, params):
    """Pure-JAX f32 reference (lax.conv) with the same training-mode BN semantics."""
    Cin = params["w1"].shape[0]
    Cb = params["w1"].shape[1]
    Cout = params["w3"].shape[1]
    x = jnp.transpose(x_nchw, (0, 2, 3, 1)).astype(jnp.float32)   # NHWC

    def bn_relu(h, g, b):
        mean = h.mean(axis=(0, 1, 2), keepdims=True)
        var = ((h - mean) ** 2).mean(axis=(0, 1, 2), keepdims=True)
        return jnp.maximum((h - mean) * lax.rsqrt(var + EPS) * g.reshape(1, 1, 1, -1)
                           + b.reshape(1, 1, 1, -1), 0.0)

    def conv(h, w_hwio, padding):
        return lax.conv_general_dilated(h, w_hwio, (1, 1), padding,
                                        dimension_numbers=("NHWC", "HWIO", "NHWC"))

    h = bn_relu(x, params["g1"], params["b1"])
    h = conv(h, params["w1"].reshape(1, 1, Cin, Cb), "VALID")
    h = bn_relu(h, params["g2"], params["b2"])
    h = conv(h, params["w2"].reshape(3, 3, Cb, Cb), [(1, 1), (1, 1)])
    h = bn_relu(h, params["g3"], params["b3"])
    h = conv(h, params["w3"].reshape(1, 1, Cb, Cout), "VALID") + params["bias3"].reshape(1, 1, 1, -1)
    ws = params.get("ws", None)
    res = x if ws is None else conv(x, ws.reshape(1, 1, Cin, Cout), "VALID")
    return jnp.transpose(h + res, (0, 3, 1, 2))                   # back to NCHW


def _make_params(key, Cin, Cout, with_shortcut):
    Cb = Cout // 4
    ks = jax.random.split(key, 12)
    p = {
        "g1": 1.0 + 0.1 * jax.random.normal(ks[0], (1, Cin), jnp.float32),
        "b1": 0.1 * jax.random.normal(ks[1], (1, Cin), jnp.float32),
        "w1": jax.random.normal(ks[2], (Cin, Cb), jnp.float32) / math.sqrt(Cin),
        "g2": 1.0 + 0.1 * jax.random.normal(ks[3], (1, Cb), jnp.float32),
        "b2": 0.1 * jax.random.normal(ks[4], (1, Cb), jnp.float32),
        "w2": jax.random.normal(ks[5], (9, Cb, Cb), jnp.float32) / math.sqrt(9 * Cb),
        "g3": 1.0 + 0.1 * jax.random.normal(ks[6], (1, Cb), jnp.float32),
        "b3": 0.1 * jax.random.normal(ks[7], (1, Cb), jnp.float32),
        "w3": jax.random.normal(ks[8], (Cb, Cout), jnp.float32) / math.sqrt(Cb),
        "bias3": 0.1 * jax.random.normal(ks[9], (1, Cout), jnp.float32),
    }
    if with_shortcut:
        p["ws"] = jax.random.normal(ks[10], (Cin, Cout), jnp.float32) / math.sqrt(Cin)
    return p, ks[11]


def _check(out, ref, name):
    err = float(jnp.max(jnp.abs(out - ref)))
    scale = float(jnp.max(jnp.abs(ref)))
    assert err < 0.03 * (1.0 + scale), f"{name}: max abs err {err} (ref scale {scale})"


if __name__ == "__main__":
    key_a, key_b = jax.random.split(jax.random.PRNGKey(0))

    # Case 1: inplanes != outplanes -> 1x1 projection shortcut; narrow channels
    # (no lane padding; fallback stats path).
    N, Cin, Cout, H, W = 2, 8, 16, 16, 16
    params, kx = _make_params(key_a, Cin, Cout, with_shortcut=True)
    x = jax.random.normal(kx, (N, Cin, H, W), jnp.float32)
    out = jax.block_until_ready(bottleneck_forward(x, params, stride=1))
    assert out.shape == (N, Cout, H, W), out.shape
    _check(out, jax.block_until_ready(reference_bottleneck(x, params)), "projection shortcut")

    # Case 2: inplanes == outplanes -> identity shortcut; Cb=64 exercises the lane-dense
    # (pad-to-128) bf16 intermediates and the per-sublane stats path.
    params2, kx2 = _make_params(key_b, 256, 256, with_shortcut=False)
    x2 = jax.random.normal(kx2, (2, 256, 8, 8), jnp.float32)
    out2 = jax.block_until_ready(bottleneck_forward(x2, params2, stride=1))
    assert out2.shape == (2, 256, 8, 8), out2.shape
    _check(out2, jax.block_until_ready(reference_bottleneck(x2, params2)), "identity shortcut")

    print("KERNEL_OK")
</pallas_src>

<mosaic_0001>
module attributes {stable_mosaic.version = 11 : i64} {
  func.func @kernel(%arg0: i32, %arg1: memref<512x8xbf16, #tpu.memory_space<vmem>>, %arg2: memref<1x8xf32, #tpu.memory_space<vmem>>, %arg3: memref<1x8xf32, #tpu.memory_space<vmem>>, %arg4: memref<8x4xbf16, #tpu.memory_space<vmem>>, %arg5: memref<512x4xbf16, #tpu.memory_space<vmem>>, %arg6: memref<16x4xf32, #tpu.memory_space<vmem>>) attributes {dimension_semantics = [#tpu.dimension_semantics<arbitrary>], iteration_bounds = array<i64: 1>, scalar_prefetch = 0 : i64, scratch_operands = 0 : i64, tpu.core_type = #tpu.core_type<tc>, window_params = [{transform_indices = @transform_0, window_bounds = array<i64: 512, 8>}, {pipeline_mode = #tpu.pipeline_mode<synchronous>, transform_indices = @transform_1, window_bounds = array<i64: 1, 8>}, {pipeline_mode = #tpu.pipeline_mode<synchronous>, transform_indices = @transform_2, window_bounds = array<i64: 1, 8>}, {pipeline_mode = #tpu.pipeline_mode<synchronous>, transform_indices = @transform_3, window_bounds = array<i64: 8, 4>}, {transform_indices = @transform_4, window_bounds = array<i64: 512, 4>}, {pipeline_mode = #tpu.pipeline_mode<synchronous>, transform_indices = @transform_5, window_bounds = array<i64: 16, 4>}]} {
    %c0_i32 = arith.constant 0 : i32
    %0 = arith.cmpi eq, %arg0, %c0_i32 : i32
    %1 = arith.extui %0 : i1 to i32
    %c0_i32_0 = arith.constant 0 : i32
    %2 = arith.cmpi ne, %1, %c0_i32_0 : i32
    scf.if %2 {
      %cst_20 = arith.constant 0.000000e+00 : f32
      %29 = vector.broadcast %cst_20 : f32 to vector<16x4xf32>
      %c0_21 = arith.constant 0 : index
      %c0_22 = arith.constant 0 : index
      %30 = vector.load %arg6[%c0_21, %c0_22] : memref<16x4xf32, #tpu.memory_space<vmem>>, vector<16x4xf32>
      tpu.vector_store %arg6[%c0_21, %c0_22], %29 {strides = array<i32>} : memref<16x4xf32, #tpu.memory_space<vmem>>, vector<16x4xf32>,
    } else {
    }
    %c0 = arith.constant 0 : index
    %c0_1 = arith.constant 0 : index
    %3 = vector.load %arg1[%c0, %c0_1] : memref<512x8xbf16, #tpu.memory_space<vmem>>, vector<512x8xbf16>
    %4 = arith.extf %3 : vector<512x8xbf16> to vector<512x8xf32>
    %c0_2 = arith.constant 0 : index
    %c0_3 = arith.constant 0 : index
    %5 = vector.load %arg2[%c0_2, %c0_3] : memref<1x8xf32, #tpu.memory_space<vmem>>, vector<1x8xf32>
    %6 = vector.broadcast %5 : vector<1x8xf32> to vector<512x8xf32>
    %7 = arith.mulf %4, %6 : vector<512x8xf32>
    %c0_4 = arith.constant 0 : index
    %c0_5 = arith.constant 0 : index
    %8 = vector.load %arg3[%c0_4, %c0_5] : memref<1x8xf32, #tpu.memory_space<vmem>>, vector<1x8xf32>
    %9 = vector.broadcast %8 : vector<1x8xf32> to vector<512x8xf32>
    %10 = arith.addf %7, %9 : vector<512x8xf32>
    %cst = arith.constant 0.000000e+00 : f32
    %11 = vector.broadcast %cst : f32 to vector<512x8xf32>
    %12 = arith.maximumf %10, %11 : vector<512x8xf32>
    %13 = arith.truncf %12 : vector<512x8xf32> to vector<512x8xbf16>
    %c0_6 = arith.constant 0 : index
    %c0_7 = arith.constant 0 : index
    %14 = vector.load %arg4[%c0_6, %c0_7] : memref<8x4xbf16, #tpu.memory_space<vmem>>, vector<8x4xbf16>
    %cst_8 = arith.constant dense<0.000000e+00> : vector<512x4xf32>
    %15 = tpu.matmul %13, %14, %cst_8 {dimension_numbers = #tpu.dot_dimension_numbers<[1], [0], [0], [1], [0, 0, 1, 1], [], []>} : vector<512x8xbf16>, vector<8x4xbf16>, vector<512x4xf32> -> vector<512x4xf32>
    %16 = arith.truncf %15 : vector<512x4xf32> to vector<512x4xbf16>
    %c0_9 = arith.constant 0 : index
    %c0_10 = arith.constant 0 : index
    %17 = vector.load %arg5[%c0_9, %c0_10] : memref<512x4xbf16, #tpu.memory_space<vmem>>, vector<512x4xbf16>
    tpu.vector_store %arg5[%c0_9, %c0_10], %16 {strides = array<i32>} : memref<512x4xbf16, #tpu.memory_space<vmem>>, vector<512x4xbf16>,
    %c0_11 = arith.constant 0 : index
    %c0_12 = arith.constant 0 : index
    %18 = vector.load %arg6[%c0_11, %c0_12] : memref<16x4xf32, #tpu.memory_space<vmem>>, vector<1x4xf32>
    %cst_13 = arith.constant dense<0.000000e+00> : vector<4xf32>
    %19 = vector.multi_reduction <add>, %15, %cst_13 [0] : vector<512x4xf32> to vector<4xf32>
    %20 = vector.shape_cast %19 : vector<4xf32> to vector<1x4xf32>
    %21 = arith.addf %18, %20 : vector<1x4xf32>
    %c0_14 = arith.constant 0 : index
    %c0_15 = arith.constant 0 : index
    %22 = vector.load %arg6[%c0_14, %c0_15] : memref<16x4xf32, #tpu.memory_space<vmem>>, vector<1x4xf32>
    tpu.vector_store %arg6[%c0_14, %c0_15], %21 {strides = array<i32>} : memref<16x4xf32, #tpu.memory_space<vmem>>, vector<1x4xf32>,
    %c8 = arith.constant 8 : index
    %c0_16 = arith.constant 0 : index
    %23 = vector.load %arg6[%c8, %c0_16] : memref<16x4xf32, #tpu.memory_space<vmem>>, vector<1x4xf32>
    %24 = arith.mulf %15, %15 : vector<512x4xf32>
    %cst_17 = arith.constant dense<0.000000e+00> : vector<4xf32>
    %25 = vector.multi_reduction <add>, %24, %cst_17 [0] : vector<512x4xf32> to vector<4xf32>
    %26 = vector.shape_cast %25 : vector<4xf32> to vector<1x4xf32>
    %27 = arith.addf %23, %26 : vector<1x4xf32>
    %c8_18 = arith.constant 8 : index
    %c0_19 = arith.constant 0 : index
    %28 = vector.load %arg6[%c8_18, %c0_19] : memref<16x4xf32, #tpu.memory_space<vmem>>, vector<1x4xf32>
    tpu.vector_store %arg6[%c8_18, %c0_19], %27 {strides = array<i32>} : memref<16x4xf32, #tpu.memory_space<vmem>>, vector<1x4xf32>,
    return
  }
  func.func @transform_0(%arg0: i32) -> (i32, i32) {
    %c0_i32 = arith.constant 0 : i32
    %c0_i32_0 = arith.constant 0 : i32
    return %arg0, %c0_i32 : i32, i32
  }
  func.func @transform_1(%arg0: i32) -> (i32, i32) {
    %c0_i32 = arith.constant 0 : i32
    %c0_i32_0 = arith.constant 0 : i32
    %c0_i32_1 = arith.constant 0 : i32
    return %c0_i32, %c0_i32_0 : i32, i32
  }
  func.func @transform_2(%arg0: i32) -> (i32, i32) {
    %c0_i32 = arith.constant 0 : i32
    %c0_i32_0 = arith.constant 0 : i32
    %c0_i32_1 = arith.constant 0 : i32
    return %c0_i32, %c0_i32_0 : i32, i32
  }
  func.func @transform_3(%arg0: i32) -> (i32, i32) {
    %c0_i32 = arith.constant 0 : i32
    %c0_i32_0 = arith.constant 0 : i32
    %c0_i32_1 = arith.constant 0 : i32
    return %c0_i32, %c0_i32_0 : i32, i32
  }
  func.func @transform_4(%arg0: i32) -> (i32, i32) {
    %c0_i32 = arith.constant 0 : i32
    %c0_i32_0 = arith.constant 0 : i32
    return %arg0, %c0_i32 : i32, i32
  }
  func.func @transform_5(%arg0: i32) -> (i32, i32) {
    %c0_i32 = arith.constant 0 : i32
    %c0_i32_0 = arith.constant 0 : i32
    %c0_i32_1 = arith.constant 0 : i32
    return %c0_i32, %c0_i32_0 : i32, i32
  }
}

</mosaic_0001>

<llo_original>
// kernel: tpu_custom_call.1
$region0: #{tpu_custom_call.1}
  #allocation0 [shape = 'u32[]', space=smem, size = 0x4, offset = 0x4, fixed_abs, tag = 'smem constant byte address 0x4 - core index']
  #allocation1 [shape = 'u32[144,128]{1,0:T(1,128)}', space=vmem, size = 0x12000, scoped, tag = 'internal scratch']
  %s0 = inlined_call_operand.vmem [shape: bf16[512,8], index: 0, kind: input, shape index: {}]
  %s1 = inlined_call_operand.vmem [shape: f32[1,8], index: 1, kind: input, shape index: {}]
  %s2 = inlined_call_operand.vmem [shape: f32[1,8], index: 2, kind: input, shape index: {}]
  %s3 = inlined_call_operand.vmem [shape: bf16[8,4], index: 3, kind: input, shape index: {}]
  %s4 = inlined_call_operand.vmem [shape: bf16[512,4], index: 4, kind: output, shape index: {0}]
  %s5 = inlined_call_operand.vmem [shape: f32[16,4], index: 5, kind: output, shape index: {1}]
  %6 = xla_tuple %s4, %s5
  %s7 = sld [smem:[#allocation0]]
  $region38: #{tpu_custom_call.1} parent=0
    _
  %s9 = ssub.s32 1, %s7
  %s10 = scalar_select 0, %s9, %s7
  // Predicated region
  $region2: #{tpu_custom_call.1} parent=0 // pred_check
    _
  $region3: #{tpu_custom_call.1} parent=0 // pred_check_branch
    %12 = sbr.rel (0) target = $region5
  $region4: #{tpu_custom_call.1} parent=0 // pred_region
    _
  $region5: #{tpu_custom_call.1} parent=0 // pred_fallthru
    _
  // Predicated region
  $region6: #{tpu_custom_call.1} parent=0 // pred_check
    _
  $region7: #{tpu_custom_call.1} parent=0 // pred_check_branch
    %14 = sbr.rel (0) target = $region9
  $region8: #{tpu_custom_call.1} parent=0 // pred_region
    _
  $region9: #{tpu_custom_call.1} parent=0 // pred_fallthru
    _
  // Predicated region
  $region10: #{tpu_custom_call.1} parent=0 // pred_check
    _
  $region11: #{tpu_custom_call.1} parent=0 // pred_check_branch
    %16 = sbr.rel (0) target = $region13
  $region12: #{tpu_custom_call.1} parent=0 // pred_region
    _
  $region13: #{tpu_custom_call.1} parent=0 // pred_fallthru
    _
  // Predicated region
  $region14: #{tpu_custom_call.1} parent=0 // pred_check
    _
  $region15: #{tpu_custom_call.1} parent=0 // pred_check_branch
    %18 = sbr.rel (0) target = $region17
  $region16: #{tpu_custom_call.1} parent=0 // pred_region
    _
  $region17: #{tpu_custom_call.1} parent=0 // pred_fallthru
    _
  %p20 = scmp.eq.s32.totalorder 0, 0
  // Predicated region
  $region18: #{tpu_custom_call.1} parent=0 // pred_check
    %p21 = pneg %p20
  $region19: #{tpu_custom_call.1} parent=0 // pred_check_branch
    %23 = sbr.rel (%p21) target = $region21
  $region20: #{tpu_custom_call.1} parent=0 // pred_region
    %vm24 = vcmask 31744
    %25 = vst.msk [vmem:[%s5] sm:$0xff] %vm24, 0.0
    %26 = vst.msk [vmem:[%s5 + $0x8] sm:$0xff] %vm24, 0.0
  $region21: #{tpu_custom_call.1} parent=0 // pred_fallthru
    _
  %v27 = vld [vmem:[%s0] sm:$0xf]
  %v28 = vld [vmem:[%s0 + $0x4] sm:$0xf]
  %v29 = vld [vmem:[%s0 + $0x8] sm:$0xf]
  %v30 = vld [vmem:[%s0 + $0xc] sm:$0xf]
  %v31 = vld [vmem:[%s0 + $0x10] sm:$0xf]
  %v32 = vld [vmem:[%s0 + $0x14] sm:$0xf]
  %v33 = vld [vmem:[%s0 + $0x18] sm:$0xf]
  %v34 = vld [vmem:[%s0 + $0x1c] sm:$0xf]
  %v35 = vld [vmem:[%s0 + $0x20] sm:$0xf]
  %v36 = vld [vmem:[%s0 + $0x24] sm:$0xf]
  %v37 = vld [vmem:[%s0 + $0x28] sm:$0xf]
  %v38 = vld [vmem:[%s0 + $0x2c] sm:$0xf]
  %v39 = vld [vmem:[%s0 + $0x30] sm:$0xf]
  %v40 = vld [vmem:[%s0 + $0x34] sm:$0xf]
  %v41 = vld [vmem:[%s0 + $0x38] sm:$0xf]
  %v42 = vld [vmem:[%s0 + $0x3c] sm:$0xf]
  %v43 = vld [vmem:[%s0 + $0x40] sm:$0xf]
  %v44 = vld [vmem:[%s0 + $0x44] sm:$0xf]
  %v45 = vld [vmem:[%s0 + $0x48] sm:$0xf]
  %v46 = vld [vmem:[%s0 + $0x4c] sm:$0xf]
  %v47 = vld [vmem:[%s0 + $0x50] sm:$0xf]
  %v48 = vld [vmem:[%s0 + $0x54] sm:$0xf]
  %v49 = vld [vmem:[%s0 + $0x58] sm:$0xf]
  %v50 = vld [vmem:[%s0 + $0x5c] sm:$0xf]
  %v51 = vld [vmem:[%s0 + $0x60] sm:$0xf]
  %v52 = vld [vmem:[%s0 + $0x64] sm:$0xf]
  %v53 = vld [vmem:[%s0 + $0x68] sm:$0xf]
  %v54 = vld [vmem:[%s0 + $0x6c] sm:$0xf]
  %v55 = vld [vmem:[%s0 + $0x70] sm:$0xf]
  %v56 = vld [vmem:[%s0 + $0x74] sm:$0xf]
  %v57 = vld [vmem:[%s0 + $0x78] sm:$0xf]
  %v58 = vld [vmem:[%s0 + $0x7c] sm:$0xf]
  %v59 = vld [vmem:[%s0 + $0x80] sm:$0xf]
  %v60 = vld [vmem:[%s0 + $0x84] sm:$0xf]
  %v61 = vld [vmem:[%s0 + $0x88] sm:$0xf]
  %v62 = vld [vmem:[%s0 + $0x8c] sm:$0xf]
  %v63 = vld [vmem:[%s0 + $0x90] sm:$0xf]
  %v64 = vld [vmem:[%s0 + $0x94] sm:$0xf]
  %v65 = vld [vmem:[%s0 + $0x98] sm:$0xf]
  %v66 = vld [vmem:[%s0 + $0x9c] sm:$0xf]
  %v67 = vld [vmem:[%s0 + $0xa0] sm:$0xf]
  %v68 = vld [vmem:[%s0 + $0xa4] sm:$0xf]
  %v69 = vld [vmem:[%s0 + $0xa8] sm:$0xf]
  %v70 = vld [vmem:[%s0 + $0xac] sm:$0xf]
  %v71 = vld [vmem:[%s0 + $0xb0] sm:$0xf]
  %v72 = vld [vmem:[%s0 + $0xb4] sm:$0xf]
  %v73 = vld [vmem:[%s0 + $0xb8] sm:$0xf]
  %v74 = vld [vmem:[%s0 + $0xbc] sm:$0xf]
  %v75 = vld [vmem:[%s0 + $0xc0] sm:$0xf]
  %v76 = vld [vmem:[%s0 + $0xc4] sm:$0xf]
  %v77 = vld [vmem:[%s0 + $0xc8] sm:$0xf]
  %v78 = vld [vmem:[%s0 + $0xcc] sm:$0xf]
  %v79 = vld [vmem:[%s0 + $0xd0] sm:$0xf]
  %v80 = vld [vmem:[%s0 + $0xd4] sm:$0xf]
  %v81 = vld [vmem:[%s0 + $0xd8] sm:$0xf]
  %v82 = vld [vmem:[%s0 + $0xdc] sm:$0xf]
  %v83 = vld [vmem:[%s0 + $0xe0] sm:$0xf]
  %v84 = vld [vmem:[%s0 + $0xe4] sm:$0xf]
  %v85 = vld [vmem:[%s0 + $0xe8] sm:$0xf]
  %v86 = vld [vmem:[%s0 + $0xec] sm:$0xf]
  %v87 = vld [vmem:[%s0 + $0xf0] sm:$0xf]
  %v88 = vld [vmem:[%s0 + $0xf4] sm:$0xf]
  %v89 = vld [vmem:[%s0 + $0xf8] sm:$0xf]
  %v90 = vld [vmem:[%s0 + $0xfc] sm:$0xf]
  %v91 = vunpack.c.l.bf16 %v27
  %v92 = vunpack.c.l.bf16 %v28
  %v93 = vunpack.c.l.bf16 %v29
  %v94 = vunpack.c.l.bf16 %v30
  %v95 = vunpack.c.l.bf16 %v31
  %v96 = vunpack.c.l.bf16 %v32
  %v97 = vunpack.c.l.bf16 %v33
  %v98 = vunpack.c.l.bf16 %v34
  %v99 = vunpack.c.l.bf16 %v35
  %v100 = vunpack.c.l.bf16 %v36
  %v101 = vunpack.c.l.bf16 %v37
  %v102 = vunpack.c.l.bf16 %v38
  %v103 = vunpack.c.l.bf16 %v39
  %v104 = vunpack.c.l.bf16 %v40
  %v105 = vunpack.c.l.bf16 %v41
  %v106 = vunpack.c.l.bf16 %v42
  %v107 = vunpack.c.l.bf16 %v43
  %v108 = vunpack.c.l.bf16 %v44
  %v109 = vunpack.c.l.bf16 %v45
  %v110 = vunpack.c.l.bf16 %v46
  %v111 = vunpack.c.l.bf16 %v47
  %v112 = vunpack.c.l.bf16 %v48
  %v113 = vunpack.c.l.bf16 %v49
  %v114 = vunpack.c.l.bf16 %v50
  %v115 = vunpack.c.l.bf16 %v51
  %v116 = vunpack.c.l.bf16 %v52
  %v117 = vunpack.c.l.bf16 %v53
  %v118 = vunpack.c.l.bf16 %v54
  %v119 = vunpack.c.l.bf16 %v55
  %v120 = vunpack.c.l.bf16 %v56
  %v121 = vunpack.c.l.bf16 %v57
  %v122 = vunpack.c.l.bf16 %v58
  %v123 = vunpack.c.l.bf16 %v59
  %v124 = vunpack.c.l.bf16 %v60
  %v125 = vunpack.c.l.bf16 %v61
  %v126 = vunpack.c.l.bf16 %v62
  %v127 = vunpack.c.l.bf16 %v63
  %v128 = vunpack.c.l.bf16 %v64
  %v129 = vunpack.c.l.bf16 %v65
  %v130 = vunpack.c.l.bf16 %v66
  %v131 = vunpack.c.l.bf16 %v67
  %v132 = vunpack.c.l.bf16 %v68
  %v133 = vunpack.c.l.bf16 %v69
  %v134 = vunpack.c.l.bf16 %v70
  %v135 = vunpack.c.l.bf16 %v71
  %v136 = vunpack.c.l.bf16 %v72
  %v137 = vunpack.c.l.bf16 %v73
  %v138 = vunpack.c.l.bf16 %v74
  %v139 = vunpack.c.l.bf16 %v75
  %v140 = vunpack.c.l.bf16 %v76
  %v141 = vunpack.c.l.bf16 %v77
  %v142 = vunpack.c.l.bf16 %v78
  %v143 = vunpack.c.l.bf16 %v79
  %v144 = vunpack.c.l.bf16 %v80
  %v145 = vunpack.c.l.bf16 %v81
  %v146 = vunpack.c.l.bf16 %v82
  %v147 = vunpack.c.l.bf16 %v83
  %v148 = vunpack.c.l.bf16 %v84
  %v149 = vunpack.c.l.bf16 %v85
  %v150 = vunpack.c.l.bf16 %v86
  %v151 = vunpack.c.l.bf16 %v87
  %v152 = vunpack.c.l.bf16 %v88
  %v153 = vunpack.c.l.bf16 %v89
  %v154 = vunpack.c.l.bf16 %v90
  %v155 = vld [vmem:[%s1] sm:$0x1]
  %v157 = vlaneseq
  %v158 = vshrl.u32 %v157, 7
  %v159 = vsub.s32 0, %v158
  %v160 = vrot.slane %v155, %v159
  %v162 = vmul.f32 %v91, %v160
  %v163 = vmul.f32 %v92, %v160
  %v164 = vmul.f32 %v93, %v160
  %v165 = vmul.f32 %v94, %v160
  %v166 = vmul.f32 %v95, %v160
  %v167 = vmul.f32 %v96, %v160
  %v168 = vmul.f32 %v97, %v160
  %v169 = vmul.f32 %v98, %v160
  %v170 = vmul.f32 %v99, %v160
  %v171 = vmul.f32 %v100, %v160
  %v172 = vmul.f32 %v101, %v160
  %v173 = vmul.f32 %v102, %v160
  %v174 = vmul.f32 %v103, %v160
  %v175 = vmul.f32 %v104, %v160
  %v176 = vmul.f32 %v105, %v160
  %v177 = vmul.f32 %v106, %v160
  %v178 = vmul.f32 %v107, %v160
  %v179 = vmul.f32 %v108, %v160
  %v180 = vmul.f32 %v109, %v160
  %v181 = vmul.f32 %v110, %v160
  %v182 = vmul.f32 %v111, %v160
  %v183 = vmul.f32 %v112, %v160
  %v184 = vmul.f32 %v113, %v160
  %v185 = vmul.f32 %v114, %v160
  %v186 = vmul.f32 %v115, %v160
  %v187 = vmul.f32 %v116, %v160
  %v188 = vmul.f32 %v117, %v160
  %v189 = vmul.f32 %v118, %v160
  %v190 = vmul.f32 %v119, %v160
  %v191 = vmul.f32 %v120, %v160
  %v192 = vmul.f32 %v121, %v160
  %v193 = vmul.f32 %v122, %v160
  %v194 = vmul.f32 %v123, %v160
  %v195 = vmul.f32 %v124, %v160
  %v196 = vmul.f32 %v125, %v160
  %v197 = vmul.f32 %v126, %v160
  %v198 = vmul.f32 %v127, %v160
  %v199 = vmul.f32 %v128, %v160
  %v200 = vmul.f32 %v129, %v160
  %v201 = vmul.f32 %v130, %v160
  %v202 = vmul.f32 %v131, %v160
  %v203 = vmul.f32 %v132, %v160
  %v204 = vmul.f32 %v133, %v160
  %v205 = vmul.f32 %v134, %v160
  %v206 = vmul.f32 %v135, %v160
  %v207 = vmul.f32 %v136, %v160
  %v208 = vmul.f32 %v137, %v160
  %v209 = vmul.f32 %v138, %v160
  %v210 = vmul.f32 %v139, %v160
  %v211 = vmul.f32 %v140, %v160
  %v212 = vmul.f32 %v141, %v160
  %v213 = vmul.f32 %v142, %v160
  %v214 = vmul.f32 %v143, %v160
  %v215 = vmul.f32 %v144, %v160
  %v216 = vmul.f32 %v145, %v160
  %v217 = vmul.f32 %v146, %v160
  %v218 = vmul.f32 %v147, %v160
  %v219 = vmul.f32 %v148, %v160
  %v220 = vmul.f32 %v149, %v160
  %v221 = vmul.f32 %v150, %v160
  %v222 = vmul.f32 %v151, %v160
  %v223 = vmul.f32 %v152, %v160
  %v224 = vmul.f32 %v153, %v160
  %v225 = vmul.f32 %v154, %v160
  %v226 = vld [vmem:[%s2] sm:$0x1]
  %v228 = vlaneseq
  %v229 = vshrl.u32 %v228, 7
  %v230 = vsub.s32 0, %v229
  %v231 = vrot.slane %v226, %v230
  %v233 = vadd.f32 %v162, %v231
  %v234 = vadd.f32 %v163, %v231
  %v235 = vadd.f32 %v164, %v231
  %v236 = vadd.f32 %v165, %v231
  %v237 = vadd.f32 %v166, %v231
  %v238 = vadd.f32 %v167, %v231
  %v239 = vadd.f32 %v168, %v231
  %v240 = vadd.f32 %v169, %v231
  %v241 = vadd.f32 %v170, %v231
  %v242 = vadd.f32 %v171, %v231
  %v243 = vadd.f32 %v172, %v231
  %v244 = vadd.f32 %v173, %v231
  %v245 = vadd.f32 %v174, %v231
  %v246 = vadd.f32 %v175, %v231
  %v247 = vadd.f32 %v176, %v231
  %v248 = vadd.f32 %v177, %v231
  %v249 = vadd.f32 %v178, %v231
  %v250 = vadd.f32 %v179, %v231
  %v251 = vadd.f32 %v180, %v231
  %v252 = vadd.f32 %v181, %v231
  %v253 = vadd.f32 %v182, %v231
  %v254 = vadd.f32 %v183, %v231
  %v255 = vadd.f32 %v184, %v231
  %v256 = vadd.f32 %v185, %v231
  %v257 = vadd.f32 %v186, %v231
  %v258 = vadd.f32 %v187, %v231
  %v259 = vadd.f32 %v188, %v231
  %v260 = vadd.f32 %v189, %v231
  %v261 = vadd.f32 %v190, %v231
  %v262 = vadd.f32 %v191, %v231
  %v263 = vadd.f32 %v192, %v231
  %v264 = vadd.f32 %v193, %v231
  %v265 = vadd.f32 %v194, %v231
  %v266 = vadd.f32 %v195, %v231
  %v267 = vadd.f32 %v196, %v231
  %v268 = vadd.f32 %v197, %v231
  %v269 = vadd.f32 %v198, %v231
  %v270 = vadd.f32 %v199, %v231
  %v271 = vadd.f32 %v200, %v231
  %v272 = vadd.f32 %v201, %v231
  %v273 = vadd.f32 %v202, %v231
  %v274 = vadd.f32 %v203, %v231
  %v275 = vadd.f32 %v204, %v231
  %v276 = vadd.f32 %v205, %v231
  %v277 = vadd.f32 %v206, %v231
  %v278 = vadd.f32 %v207, %v231
  %v279 = vadd.f32 %v208, %v231
  %v280 = vadd.f32 %v209, %v231
  %v281 = vadd.f32 %v210, %v231
  %v282 = vadd.f32 %v211, %v231
  %v283 = vadd.f32 %v212, %v231
  %v284 = vadd.f32 %v213, %v231
  %v285 = vadd.f32 %v214, %v231
  %v286 = vadd.f32 %v215, %v231
  %v287 = vadd.f32 %v216, %v231
  %v288 = vadd.f32 %v217, %v231
  %v289 = vadd.f32 %v218, %v231
  %v290 = vadd.f32 %v219, %v231
  %v291 = vadd.f32 %v220, %v231
  %v292 = vadd.f32 %v221, %v231
  %v293 = vadd.f32 %v222, %v231
  %v294 = vadd.f32 %v223, %v231
  %v295 = vadd.f32 %v224, %v231
  %v296 = vadd.f32 %v225, %v231
  %v297 = vmax.f32 %v233, 0.0
  %v298 = vmax.f32 %v234, 0.0
  %v299 = vmax.f32 %v235, 0.0
  %v300 = vmax.f32 %v236, 0.0
  %v301 = vmax.f32 %v237, 0.0
  %v302 = vmax.f32 %v238, 0.0
  %v303 = vmax.f32 %v239, 0.0
  %v304 = vmax.f32 %v240, 0.0
  %v305 = vmax.f32 %v241, 0.0
  %v306 = vmax.f32 %v242, 0.0
  %v307 = vmax.f32 %v243, 0.0
  %v308 = vmax.f32 %v244, 0.0
  %v309 = vmax.f32 %v245, 0.0
  %v310 = vmax.f32 %v246, 0.0
  %v311 = vmax.f32 %v247, 0.0
  %v312 = vmax.f32 %v248, 0.0
  %v313 = vmax.f32 %v249, 0.0
  %v314 = vmax.f32 %v250, 0.0
  %v315 = vmax.f32 %v251, 0.0
  %v316 = vmax.f32 %v252, 0.0
  %v317 = vmax.f32 %v253, 0.0
  %v318 = vmax.f32 %v254, 0.0
  %v319 = vmax.f32 %v255, 0.0
  %v320 = vmax.f32 %v256, 0.0
  %v321 = vmax.f32 %v257, 0.0
  %v322 = vmax.f32 %v258, 0.0
  %v323 = vmax.f32 %v259, 0.0
  %v324 = vmax.f32 %v260, 0.0
  %v325 = vmax.f32 %v261, 0.0
  %v326 = vmax.f32 %v262, 0.0
  %v327 = vmax.f32 %v263, 0.0
  %v328 = vmax.f32 %v264, 0.0
  %v329 = vmax.f32 %v265, 0.0
  %v330 = vmax.f32 %v266, 0.0
  %v331 = vmax.f32 %v267, 0.0
  %v332 = vmax.f32 %v268, 0.0
  %v333 = vmax.f32 %v269, 0.0
  %v334 = vmax.f32 %v270, 0.0
  %v335 = vmax.f32 %v271, 0.0
  %v336 = vmax.f32 %v272, 0.0
  %v337 = vmax.f32 %v273, 0.0
  %v338 = vmax.f32 %v274, 0.0
  %v339 = vmax.f32 %v275, 0.0
  %v340 = vmax.f32 %v276, 0.0
  %v341 = vmax.f32 %v277, 0.0
  %v342 = vmax.f32 %v278, 0.0
  %v343 = vmax.f32 %v279, 0.0
  %v344 = vmax.f32 %v280, 0.0
  %v345 = vmax.f32 %v281, 0.0
  %v346 = vmax.f32 %v282, 0.0
  %v347 = vmax.f32 %v283, 0.0
  %v348 = vmax.f32 %v284, 0.0
  %v349 = vmax.f32 %v285, 0.0
  %v350 = vmax.f32 %v286, 0.0
  %v351 = vmax.f32 %v287, 0.0
  %v352 = vmax.f32 %v288, 0.0
  %v353 = vmax.f32 %v289, 0.0
  %v354 = vmax.f32 %v290, 0.0
  %v355 = vmax.f32 %v291, 0.0
  %v356 = vmax.f32 %v292, 0.0
  %v357 = vmax.f32 %v293, 0.0
  %v358 = vmax.f32 %v294, 0.0
  %v359 = vmax.f32 %v295, 0.0
  %v360 = vmax.f32 %v296, 0.0
  %v361 = vpack.c.bf16 %v298, %v297
  %v362 = vpack.c.bf16 %v300, %v299
  %v363 = vpack.c.bf16 %v302, %v301
  %v364 = vpack.c.bf16 %v304, %v303
  %v365 = vpack.c.bf16 %v306, %v305
  %v366 = vpack.c.bf16 %v308, %v307
  %v367 = vpack.c.bf16 %v310, %v309
  %v368 = vpack.c.bf16 %v312, %v311
  %v369 = vpack.c.bf16 %v314, %v313
  %v370 = vpack.c.bf16 %v316, %v315
  %v371 = vpack.c.bf16 %v318, %v317
  %v372 = vpack.c.bf16 %v320, %v319
  %v373 = vpack.c.bf16 %v322, %v321
  %v374 = vpack.c.bf16 %v324, %v323
  %v375 = vpack.c.bf16 %v326, %v325
  %v376 = vpack.c.bf16 %v328, %v327
  %v377 = vpack.c.bf16 %v330, %v329
  %v378 = vpack.c.bf16 %v332, %v331
  %v379 = vpack.c.bf16 %v334, %v333
  %v380 = vpack.c.bf16 %v336, %v335
  %v381 = vpack.c.bf16 %v338, %v337
  %v382 = vpack.c.bf16 %v340, %v339
  %v383 = vpack.c.bf16 %v342, %v341
  %v384 = vpack.c.bf16 %v344, %v343
  %v385 = vpack.c.bf16 %v346, %v345
  %v386 = vpack.c.bf16 %v348, %v347
  %v387 = vpack.c.bf16 %v350, %v349
  %v388 = vpack.c.bf16 %v352, %v351
  %v389 = vpack.c.bf16 %v354, %v353
  %v390 = vpack.c.bf16 %v356, %v355
  %v391 = vpack.c.bf16 %v358, %v357
  %v392 = vpack.c.bf16 %v360, %v359
  %v393 = vld [vmem:[%s3] sm:$0xf]
  %vm394 = vcmask 64512
  %v396 = vsel %vm394, %v361, 0
  %v399 = vsel %vm394, %v362, 0
  %v402 = vsel %vm394, %v363, 0
  %v405 = vsel %vm394, %v364, 0
  %v408 = vsel %vm394, %v365, 0
  %v411 = vsel %vm394, %v366, 0
  %v414 = vsel %vm394, %v367, 0
  %v417 = vsel %vm394, %v368, 0
  %v420 = vsel %vm394, %v369, 0
  %v423 = vsel %vm394, %v370, 0
  %v426 = vsel %vm394, %v371, 0
  %v429 = vsel %vm394, %v372, 0
  %v432 = vsel %vm394, %v373, 0
  %v435 = vsel %vm394, %v374, 0
  %v438 = vsel %vm394, %v375, 0
  %v441 = vsel %vm394, %v376, 0
  %v444 = vsel %vm394, %v377, 0
  %v447 = vsel %vm394, %v378, 0
  %v450 = vsel %vm394, %v379, 0
  %v453 = vsel %vm394, %v380, 0
  %v456 = vsel %vm394, %v381, 0
  %v459 = vsel %vm394, %v382, 0
  %v462 = vsel %vm394, %v383, 0
  %v465 = vsel %vm394, %v384, 0
  %v468 = vsel %vm394, %v385, 0
  %v471 = vsel %vm394, %v386, 0
  %v474 = vsel %vm394, %v387, 0
  %v477 = vsel %vm394, %v388, 0
  %v480 = vsel %vm394, %v389, 0
  %v483 = vsel %vm394, %v390, 0
  %v486 = vsel %vm394, %v391, 0
  %v489 = vsel %vm394, %v392, 0
  %vm491 = vcmask 1043456
  %v493 = vsel %vm491, %v393, 0
  %495 = vmatprep.subr.bf16.mxu0 0
  %496 = vmatpush1.bf16.msra.mxu0 %v493
  %497 = vmatprep.subr.bf16.mxu0 0
  %498 = vmatpush1.bf16.msra.mxu0 0
  %499 = vmatprep.subr.bf16.mxu0 0
  %500 = vmatpush1.bf16.msra.mxu0 0
  %501 = vmatprep.subr.bf16.mxu0 0
  %502 = vmatpush1.bf16.msra.mxu0 0
  %503 = vmatprep.subr.bf16.mxu0 0
  %504 = vmatpush1.bf16.msra.mxu0 0
  %505 = vmatprep.subr.bf16.mxu0 0
  %506 = vmatpush1.bf16.msra.mxu0 0
  %507 = vmatprep.subr.bf16.mxu0 0
  %508 = vmatpush1.bf16.msra.mxu0 0
  %509 = vmatprep.subr.bf16.mxu0 0
  %510 = vmatpush1.bf16.msra.mxu0 0
  %511 = vmatprep.subr.bf16.mxu0 0
  %512 = vmatpush1.bf16.msra.mxu0 0
  %513 = vmatprep.subr.bf16.mxu0 0
  %514 = vmatpush1.bf16.msra.mxu0 0
  %515 = vmatprep.subr.bf16.mxu0 0
  %516 = vmatpush1.bf16.msra.mxu0 0
  %517 = vmatprep.subr.bf16.mxu0 0
  %518 = vmatpush1.bf16.msra.mxu0 0
  %519 = vmatprep.subr.bf16.mxu0 0
  %520 = vmatpush1.bf16.msra.mxu0 0
  %521 = vmatprep.subr.bf16.mxu0 0
  %522 = vmatpush1.bf16.msra.mxu0 0
  %523 = vmatprep.subr.bf16.mxu0 0
  %524 = vmatpush1.bf16.msra.mxu0 0
  %525 = vmatprep.subr.bf16.mxu0 0
  %526 = vmatpush1.bf16.msra.mxu0 0
  %527 = vmatprep.mubr.bf16.mxu0 0
  %528 = vmatmul.mubr.bf16.gmra.mrb[0].mxu0 %v396
  %v529 = vpop.f32.mrb[0].mxu0
  %v530 = vadd.f32 0.0, %v529
  %v531 = vpop.f32.mrb[0].mxu0
  %v532 = vpop.f32.mrb[0].mxu0
  %v533 = vadd.f32 0.0, %v532
  %v534 = vpop.f32.mrb[0].mxu0
  %535 = vmatprep.mubr.bf16.mxu0 0
  %536 = vmatmul.mubr.bf16.gmra.mrb[0].mxu0 %v399
  %v537 = vpop.f32.mrb[0].mxu0
  %v538 = vadd.f32 0.0, %v537
  %v539 = vpop.f32.mrb[0].mxu0
  %v540 = vpop.f32.mrb[0].mxu0
  %v541 = vadd.f32 0.0, %v540
  %v542 = vpop.f32.mrb[0].mxu0
  %543 = vmatprep.mubr.bf16.mxu0 0
  %544 = vmatmul.mubr.bf16.gmra.mrb[0].mxu0 %v402
  %v545 = vpop.f32.mrb[0].mxu0
  %v546 = vadd.f32 0.0, %v545
  %v547 = vpop.f32.mrb[0].mxu0
  %v548 = vpop.f32.mrb[0].mxu0
  %v549 = vadd.f32 0.0, %v548
  %v550 = vpop.f32.mrb[0].mxu0
  %551 = vmatprep.mubr.bf16.mxu0 0
  %552 = vmatmul.mubr.bf16.gmra.mrb[0].mxu0 %v405
  %v553 = vpop.f32.mrb[0].mxu0
  %v554 = vadd.f32 0.0, %v553
  %v555 = vpop.f32.mrb[0].mxu0
  %v556 = vpop.f32.mrb[0].mxu0
  %v557 = vadd.f32 0.0, %v556
  %v558 = vpop.f32.mrb[0].mxu0
  %559 = vmatprep.mubr.bf16.mxu0 0
  %560 = vmatmul.mubr.bf16.gmra.mrb[0].mxu0 %v408
  %v561 = vpop.f32.mrb[0].mxu0
  %v562 = vadd.f32 0.0, %v561
  %v563 = vpop.f32.mrb[0].mxu0
  %v564 = vpop.f32.mrb[0].mxu0
  %v565 = vadd.f32 0.0, %v564
  %v566 = vpop.f32.mrb[0].mxu0
  %567 = vmatprep.mubr.bf16.mxu0 0
  %568 = vmatmul.mubr.bf16.gmra.mrb[0].mxu0 %v411
  %v569 = vpop.f32.mrb[0].mxu0
  %v570 = vadd.f32 0.0, %v569
  %v571 = vpop.f32.mrb[0].mxu0
  %v572 = vpop.f32.mrb[0].mxu0
  %v573 = vadd.f32 0.0, %v572
  %v574 = vpop.f32.mrb[0].mxu0
  %575 = vmatprep.mubr.bf16.mxu0 0
  %576 = vmatmul.mubr.bf16.gmra.mrb[0].mxu0 %v414
  %v577 = vpop.f32.mrb[0].mxu0
  %v578 = vadd.f32 0.0, %v577
  %v579 = vpop.f32.mrb[0].mxu0
  %v580 = vpop.f32.mrb[0].mxu0
  %v581 = vadd.f32 0.0, %v580
  %v582 = vpop.f32.mrb[0].mxu0
  %583 = vmatprep.mubr.bf16.mxu0 0
  %584 = vmatmul.mubr.bf16.gmra.mrb[0].mxu0 %v417
  %v585 = vpop.f32.mrb[0].mxu0
  %v586 = vadd.f32 0.0, %v585
  %v587 = vpop.f32.mrb[0].mxu0
  %v588 = vpop.f32.mrb[0].mxu0
  %v589 = vadd.f32 0.0, %v588
  %v590 = vpop.f32.mrb[0].mxu0
  %591 = vmatprep.mubr.bf16.mxu0 0
  %592 = vmatmul.mubr.bf16.gmra.mrb[0].mxu0 %v420
  %v593 = vpop.f32.mrb[0].mxu0
  %v594 = vadd.f32 0.0, %v593
  %v595 = vpop.f32.mrb[0].mxu0
  %v596 = vpop.f32.mrb[0].mxu0
  %v597 = vadd.f32 0.0, %v596
  %v598 = vpop.f32.mrb[0].mxu0
  %599 = vmatprep.mubr.bf16.mxu0 0
  %600 = vmatmul.mubr.bf16.gmra.mrb[0].mxu0 %v423
  %v601 = vpop.f32.mrb[0].mxu0
  %v602 = vadd.f32 0.0, %v601
  %v603 = vpop.f32.mrb[0].mxu0
  %v604 = vpop.f32.mrb[0].mxu0
  %v605 = vadd.f32 0.0, %v604
  %v606 = vpop.f32.mrb[0].mxu0
  %607 = vmatprep.mubr.bf16.mxu0 0
  %608 = vmatmul.mubr.bf16.gmra.mrb[0].mxu0 %v426
  %v609 = vpop.f32.mrb[0].mxu0
  %v610 = vadd.f32 0.0, %v609
  %v611 = vpop.f32.mrb[0].mxu0
  %v612 = vpop.f32.mrb[0].mxu0
  %v613 = vadd.f32 0.0, %v612
  %v614 = vpop.f32.mrb[0].mxu0
  %615 = vmatprep.mubr.bf16.mxu0 0
  %616 = vmatmul.mubr.bf16.gmra.mrb[0].mxu0 %v429
  %v617 = vpop.f32.mrb[0].mxu0
  %v618 = vadd.f32 0.0, %v617
  %v619 = vpop.f32.mrb[0].mxu0
  %v620 = vpop.f32.mrb[0].mxu0
  %v621 = vadd.f32 0.0, %v620
  %v622 = vpop.f32.mrb[0].mxu0
  %623 = vmatprep.mubr.bf16.mxu0 0
  %624 = vmatmul.mubr.bf16.gmra.mrb[0].mxu0 %v432
  %v625 = vpop.f32.mrb[0].mxu0
  %v626 = vadd.f32 0.0, %v625
  %v627 = vpop.f32.mrb[0].mxu0
  %v628 = vpop.f32.mrb[0].mxu0
  %v629 = vadd.f32 0.0, %v628
  %v630 = vpop.f32.mrb[0].mxu0
  %631 = vmatprep.mubr.bf16.mxu0 0
  %632 = vmatmul.mubr.bf16.gmra.mrb[0].mxu0 %v435
  %v633 = vpop.f32.mrb[0].mxu0
  %v634 = vadd.f32 0.0, %v633
  %v635 = vpop.f32.mrb[0].mxu0
  %v636 = vpop.f32.mrb[0].mxu0
  %v637 = vadd.f32 0.0, %v636
  %v638 = vpop.f32.mrb[0].mxu0
  %639 = vmatprep.mubr.bf16.mxu0 0
  %640 = vmatmul.mubr.bf16.gmra.mrb[0].mxu0 %v438
  %v641 = vpop.f32.mrb[0].mxu0
  %v642 = vadd.f32 0.0, %v641
  %v643 = vpop.f32.mrb[0].mxu0
  %v644 = vpop.f32.mrb[0].mxu0
  %v645 = vadd.f32 0.0, %v644
  %v646 = vpop.f32.mrb[0].mxu0
  %647 = vmatprep.mubr.bf16.mxu0 0
  %648 = vmatmul.mubr.bf16.gmra.mrb[0].mxu0 %v441
  %v649 = vpop.f32.mrb[0].mxu0
  %v650 = vadd.f32 0.0, %v649
  %v651 = vpop.f32.mrb[0].mxu0
  %v652 = vpop.f32.mrb[0].mxu0
  %v653 = vadd.f32 0.0, %v652
  %v654 = vpop.f32.mrb[0].mxu0
  %655 = vmatprep.mubr.bf16.mxu0 0
  %656 = vmatmul.mubr.bf16.gmra.mrb[0].mxu0 %v444
  %v657 = vpop.f32.mrb[0].mxu0
  %v658 = vadd.f32 0.0, %v657
  %v659 = vpop.f32.mrb[0].mxu0
  %v660 = vpop.f32.mrb[0].mxu0
  %v661 = vadd.f32 0.0, %v660
  %v662 = vpop.f32.mrb[0].mxu0
  %663 = vmatprep.mubr.bf16.mxu0 0
  %664 = vmatmul.mubr.bf16.gmra.mrb[0].mxu0 %v447
  %v665 = vpop.f32.mrb[0].mxu0
  %v666 = vadd.f32 0.0, %v665
  %v667 = vpop.f32.mrb[0].mxu0
  %v668 = vpop.f32.mrb[0].mxu0
  %v669 = vadd.f32 0.0, %v668
  %v670 = vpop.f32.mrb[0].mxu0
  %671 = vmatprep.mubr.bf16.mxu0 0
  %672 = vmatmul.mubr.bf16.gmra.mrb[0].mxu0 %v450
  %v673 = vpop.f32.mrb[0].mxu0
  %v674 = vadd.f32 0.0, %v673
  %v675 = vpop.f32.mrb[0].mxu0
  %v676 = vpop.f32.mrb[0].mxu0
  %v677 = vadd.f32 0.0, %v676
  %v678 = vpop.f32.mrb[0].mxu0
  %679 = vmatprep.mubr.bf16.mxu0 0
  %680 = vmatmul.mubr.bf16.gmra.mrb[0].mxu0 %v453
  %v681 = vpop.f32.mrb[0].mxu0
  %v682 = vadd.f32 0.0, %v681
  %v683 = vpop.f32.mrb[0].mxu0
  %v684 = vpop.f32.mrb[0].mxu0
  %v685 = vadd.f32 0.0, %v684
  %v686 = vpop.f32.mrb[0].mxu0
  %687 = vmatprep.mubr.bf16.mxu0 0
  %688 = vmatmul.mubr.bf16.gmra.mrb[0].mxu0 %v456
  %v689 = vpop.f32.mrb[0].mxu0
  %v690 = vadd.f32 0.0, %v689
  %v691 = vpop.f32.mrb[0].mxu0
  %v692 = vpop.f32.mrb[0].mxu0
  %v693 = vadd.f32 0.0, %v692
  %v694 = vpop.f32.mrb[0].mxu0
  %695 = vmatprep.mubr.bf16.mxu0 0
  %696 = vmatmul.mubr.bf16.gmra.mrb[0].mxu0 %v459
  %v697 = vpop.f32.mrb[0].mxu0
  %v698 = vadd.f32 0.0, %v697
  %v699 = vpop.f32.mrb[0].mxu0
  %v700 = vpop.f32.mrb[0].mxu0
  %v701 = vadd.f32 0.0, %v700
  %v702 = vpop.f32.mrb[0].mxu0
  %703 = vmatprep.mubr.bf16.mxu0 0
  %704 = vmatmul.mubr.bf16.gmra.mrb[0].mxu0 %v462
  %v705 = vpop.f32.mrb[0].mxu0
  %v706 = vadd.f32 0.0, %v705
  %v707 = vpop.f32.mrb[0].mxu0
  %v708 = vpop.f32.mrb[0].mxu0
  %v709 = vadd.f32 0.0, %v708
  %v710 = vpop.f32.mrb[0].mxu0
  %711 = vmatprep.mubr.bf16.mxu0 0
  %712 = vmatmul.mubr.bf16.gmra.mrb[0].mxu0 %v465
  %v713 = vpop.f32.mrb[0].mxu0
  %v714 = vadd.f32 0.0, %v713
  %v715 = vpop.f32.mrb[0].mxu0
  %v716 = vpop.f32.mrb[0].mxu0
  %v717 = vadd.f32 0.0, %v716
  %v718 = vpop.f32.mrb[0].mxu0
  %719 = vmatprep.mubr.bf16.mxu0 0
  %720 = vmatmul.mubr.bf16.gmra.mrb[0].mxu0 %v468
  %v721 = vpop.f32.mrb[0].mxu0
  %v722 = vadd.f32 0.0, %v721
  %v723 = vpop.f32.mrb[0].mxu0
  %v724 = vpop.f32.mrb[0].mxu0
  %v725 = vadd.f32 0.0, %v724
  %v726 = vpop.f32.mrb[0].mxu0
  %727 = vmatprep.mubr.bf16.mxu0 0
  %728 = vmatmul.mubr.bf16.gmra.mrb[0].mxu0 %v471
  %v729 = vpop.f32.mrb[0].mxu0
  %v730 = vadd.f32 0.0, %v729
  %v731 = vpop.f32.mrb[0].mxu0
  %v732 = vpop.f32.mrb[0].mxu0
  %v733 = vadd.f32 0.0, %v732
  %v734 = vpop.f32.mrb[0].mxu0
  %735 = vmatprep.mubr.bf16.mxu0 0
  %736 = vmatmul.mubr.bf16.gmra.mrb[0].mxu0 %v474
  %v737 = vpop.f32.mrb[0].mxu0
  %v738 = vadd.f32 0.0, %v737
  %v739 = vpop.f32.mrb[0].mxu0
  %v740 = vpop.f32.mrb[0].mxu0
  %v741 = vadd.f32 0.0, %v740
  %v742 = vpop.f32.mrb[0].mxu0
  %743 = vmatprep.mubr.bf16.mxu0 0
  %744 = vmatmul.mubr.bf16.gmra.mrb[0].mxu0 %v477
  %v745 = vpop.f32.mrb[0].mxu0
  %v746 = vadd.f32 0.0, %v745
  %v747 = vpop.f32.mrb[0].mxu0
  %v748 = vpop.f32.mrb[0].mxu0
  %v749 = vadd.f32 0.0, %v748
  %v750 = vpop.f32.mrb[0].mxu0
  %751 = vmatprep.mubr.bf16.mxu0 0
  %752 = vmatmul.mubr.bf16.gmra.mrb[0].mxu0 %v480
  %v753 = vpop.f32.mrb[0].mxu0
  %v754 = vadd.f32 0.0, %v753
  %v755 = vpop.f32.mrb[0].mxu0
  %v756 = vpop.f32.mrb[0].mxu0
  %v757 = vadd.f32 0.0, %v756
  %v758 = vpop.f32.mrb[0].mxu0
  %759 = vmatprep.mubr.bf16.mxu0 0
  %760 = vmatmul.mubr.bf16.gmra.mrb[0].mxu0 %v483
  %v761 = vpop.f32.mrb[0].mxu0
  %v762 = vadd.f32 0.0, %v761
  %v763 = vpop.f32.mrb[0].mxu0
  %v764 = vpop.f32.mrb[0].mxu0
  %v765 = vadd.f32 0.0, %v764
  %v766 = vpop.f32.mrb[0].mxu0
  %767 = vmatprep.mubr.bf16.mxu0 0
  %768 = vmatmul.mubr.bf16.gmra.mrb[0].mxu0 %v486
  %v769 = vpop.f32.mrb[0].mxu0
  %v770 = vadd.f32 0.0, %v769
  %v771 = vpop.f32.mrb[0].mxu0
  %v772 = vpop.f32.mrb[0].mxu0
  %v773 = vadd.f32 0.0, %v772
  %v774 = vpop.f32.mrb[0].mxu0
  %775 = vmatprep.mubr.bf16.mxu0 0
  %776 = vmatmul.mubr.bf16.gmra.mrb[0].mxu0 %v489
  %v777 = vpop.f32.mrb[0].mxu0
  %v778 = vadd.f32 0.0, %v777
  %v779 = vpop.f32.mrb[0].mxu0
  %v780 = vpop.f32.mrb[0].mxu0
  %v781 = vadd.f32 0.0, %v780
  %v782 = vpop.f32.mrb[0].mxu0
  %783 = vdwg.mxu0
  %v784 = vpack.c.bf16 %v533, %v530
  %v785 = vpack.c.bf16 %v541, %v538
  %v786 = vpack.c.bf16 %v549, %v546
  %v787 = vpack.c.bf16 %v557, %v554
  %v788 = vpack.c.bf16 %v565, %v562
  %v789 = vpack.c.bf16 %v573, %v570
  %v790 = vpack.c.bf16 %v581, %v578
  %v791 = vpack.c.bf16 %v589, %v586
  %v792 = vpack.c.bf16 %v597, %v594
  %v793 = vpack.c.bf16 %v605, %v602
  %v794 = vpack.c.bf16 %v613, %v610
  %v795 = vpack.c.bf16 %v621, %v618
  %v796 = vpack.c.bf16 %v629, %v626
  %v797 = vpack.c.bf16 %v637, %v634
  %v798 = vpack.c.bf16 %v645, %v642
  %v799 = vpack.c.bf16 %v653, %v650
  %v800 = vpack.c.bf16 %v661, %v658
  %v801 = vpack.c.bf16 %v669, %v666
  %v802 = vpack.c.bf16 %v677, %v674
  %v803 = vpack.c.bf16 %v685, %v682
  %v804 = vpack.c.bf16 %v693, %v690
  %v805 = vpack.c.bf16 %v701, %v698
  %v806 = vpack.c.bf16 %v709, %v706
  %v807 = vpack.c.bf16 %v717, %v714
  %v808 = vpack.c.bf16 %v725, %v722
  %v809 = vpack.c.bf16 %v733, %v730
  %v810 = vpack.c.bf16 %v741, %v738
  %v811 = vpack.c.bf16 %v749, %v746
  %v812 = vpack.c.bf16 %v757, %v754
  %v813 = vpack.c.bf16 %v765, %v762
  %v814 = vpack.c.bf16 %v773, %v770
  %v815 = vpack.c.bf16 %v781, %v778
  %v848 = vunpack.c.l.b16 %v784
  %v849 = vunpack.c.h.b16 %v784
  %v850 = vunpack.c.l.b16 %v785
  %v851 = vunpack.c.h.b16 %v785
  %v852 = vunpack.c.l.b16 %v786
  %v853 = vunpack.c.h.b16 %v786
  %v854 = vunpack.c.l.b16 %v787
  %v855 = vunpack.c.h.b16 %v787
  %v856 = vunpack.c.l.b16 %v788
  %v857 = vunpack.c.h.b16 %v788
  %v858 = vunpack.c.l.b16 %v789
  %v859 = vunpack.c.h.b16 %v789
  %v860 = vunpack.c.l.b16 %v790
  %v861 = vunpack.c.h.b16 %v790
  %v862 = vunpack.c.l.b16 %v791
  %v863 = vunpack.c.h.b16 %v791
  %v864 = vunpack.c.l.b16 %v792
  %v865 = vunpack.c.h.b16 %v792
  %v866 = vunpack.c.l.b16 %v793
  %v867 = vunpack.c.h.b16 %v793
  %v868 = vunpack.c.l.b16 %v794
  %v869 = vunpack.c.h.b16 %v794
  %v870 = vunpack.c.l.b16 %v795
  %v871 = vunpack.c.h.b16 %v795
  %v872 = vunpack.c.l.b16 %v796
  %v873 = vunpack.c.h.b16 %v796
  %v874 = vunpack.c.l.b16 %v797
  %v875 = vunpack.c.h.b16 %v797
  %v876 = vunpack.c.l.b16 %v798
  %v877 = vunpack.c.h.b16 %v798
  %v878 = vunpack.c.l.b16 %v799
  %v879 = vunpack.c.h.b16 %v799
  %v880 = vunpack.c.l.b16 %v800
  %v881 = vunpack.c.h.b16 %v800
  %v882 = vunpack.c.l.b16 %v801
  %v883 = vunpack.c.h.b16 %v801
  %v884 = vunpack.c.l.b16 %v802
  %v885 = vunpack.c.h.b16 %v802
  %v886 = vunpack.c.l.b16 %v803
  %v887 = vunpack.c.h.b16 %v803
  %v888 = vunpack.c.l.b16 %v804
  %v889 = vunpack.c.h.b16 %v804
  %v890 = vunpack.c.l.b16 %v805
  %v891 = vunpack.c.h.b16 %v805
  %v892 = vunpack.c.l.b16 %v806
  %v893 = vunpack.c.h.b16 %v806
  %v894 = vunpack.c.l.b16 %v807
  %v895 = vunpack.c.h.b16 %v807
  %v896 = vunpack.c.l.b16 %v808
  %v897 = vunpack.c.h.b16 %v808
  %v898 = vunpack.c.l.b16 %v809
  %v899 = vunpack.c.h.b16 %v809
  %v900 = vunpack.c.l.b16 %v810
  %v901 = vunpack.c.h.b16 %v810
  %v902 = vunpack.c.l.b16 %v811
  %v903 = vunpack.c.h.b16 %v811
  %v904 = vunpack.c.l.b16 %v812
  %v905 = vunpack.c.h.b16 %v812
  %v906 = vunpack.c.l.b16 %v813
  %v907 = vunpack.c.h.b16 %v813
  %v908 = vunpack.c.l.b16 %v814
  %v909 = vunpack.c.h.b16 %v814
  %v910 = vunpack.c.l.b16 %v815
  %v911 = vunpack.c.h.b16 %v815
  %v912 = vpack.c.b16 %v848, %v848
  %v913 = vpack.c.b16 %v849, %v849
  %v914 = vpack.c.b16 %v850, %v850
  %v915 = vpack.c.b16 %v851, %v851
  %v916 = vpack.c.b16 %v852, %v852
  %v917 = vpack.c.b16 %v853, %v853
  %v918 = vpack.c.b16 %v854, %v854
  %v919 = vpack.c.b16 %v855, %v855
  %v920 = vpack.c.b16 %v856, %v856
  %v921 = vpack.c.b16 %v857, %v857
  %v922 = vpack.c.b16 %v858, %v858
  %v923 = vpack.c.b16 %v859, %v859
  %v924 = vpack.c.b16 %v860, %v860
  %v925 = vpack.c.b16 %v861, %v861
  %v926 = vpack.c.b16 %v862, %v862
  %v927 = vpack.c.b16 %v863, %v863
  %v928 = vpack.c.b16 %v864, %v864
  %v929 = vpack.c.b16 %v865, %v865
  %v930 = vpack.c.b16 %v866, %v866
  %v931 = vpack.c.b16 %v867, %v867
  %v932 = vpack.c.b16 %v868, %v868
  %v933 = vpack.c.b16 %v869, %v869
  %v934 = vpack.c.b16 %v870, %v870
  %v935 = vpack.c.b16 %v871, %v871
  %v936 = vpack.c.b16 %v872, %v872
  %v937 = vpack.c.b16 %v873, %v873
  %v938 = vpack.c.b16 %v874, %v874
  %v939 = vpack.c.b16 %v875, %v875
  %v940 = vpack.c.b16 %v876, %v876
  %v941 = vpack.c.b16 %v877, %v877
  %v942 = vpack.c.b16 %v878, %v878
  %v943 = vpack.c.b16 %v879, %v879
  %v944 = vpack.c.b16 %v880, %v880
  %v945 = vpack.c.b16 %v881, %v881
  %v946 = vpack.c.b16 %v882, %v882
  %v947 = vpack.c.b16 %v883, %v883
  %v948 = vpack.c.b16 %v884, %v884
  %v949 = vpack.c.b16 %v885, %v885
  %v950 = vpack.c.b16 %v886, %v886
  %v951 = vpack.c.b16 %v887, %v887
  %v952 = vpack.c.b16 %v888, %v888
  %v953 = vpack.c.b16 %v889, %v889
  %v954 = vpack.c.b16 %v890, %v890
  %v955 = vpack.c.b16 %v891, %v891
  %v956 = vpack.c.b16 %v892, %v892
  %v957 = vpack.c.b16 %v893, %v893
  %v958 = vpack.c.b16 %v894, %v894
  %v959 = vpack.c.b16 %v895, %v895
  %v960 = vpack.c.b16 %v896, %v896
  %v961 = vpack.c.b16 %v897, %v897
  %v962 = vpack.c.b16 %v898, %v898
  %v963 = vpack.c.b16 %v899, %v899
  %v964 = vpack.c.b16 %v900, %v900
  %v965 = vpack.c.b16 %v901, %v901
  %v966 = vpack.c.b16 %v902, %v902
  %v967 = vpack.c.b16 %v903, %v903
  %v968 = vpack.c.b16 %v904, %v904
  %v969 = vpack.c.b16 %v905, %v905
  %v970 = vpack.c.b16 %v906, %v906
  %v971 = vpack.c.b16 %v907, %v907
  %v972 = vpack.c.b16 %v908, %v908
  %v973 = vpack.c.b16 %v909, %v909
  %v974 = vpack.c.b16 %v910, %v910
  %v975 = vpack.c.b16 %v911, %v911
  %vm1040 = vcmask 27648
  %1041 = vst.msk [vmem:[%s4] sm:$0xf] %vm1040, %v912
  %1042 = vst.msk [vmem:[%s4 + $0x4] sm:$0xf] %vm1040, %v913
  %1043 = vst.msk [vmem:[%s4 + $0x8] sm:$0xf] %vm1040, %v914
  %1044 = vst.msk [vmem:[%s4 + $0xc] sm:$0xf] %vm1040, %v915
  %1045 = vst.msk [vmem:[%s4 + $0x10] sm:$0xf] %vm1040, %v916
  %1046 = vst.msk [vmem:[%s4 + $0x14] sm:$0xf] %vm1040, %v917
  %1047 = vst.msk [vmem:[%s4 + $0x18] sm:$0xf] %vm1040, %v918
  %1048 = vst.msk [vmem:[%s4 + $0x1c] sm:$0xf] %vm1040, %v919
  %1049 = vst.msk [vmem:[%s4 + $0x20] sm:$0xf] %vm1040, %v920
  %1050 = vst.msk [vmem:[%s4 + $0x24] sm:$0xf] %vm1040, %v921
  %1051 = vst.msk [vmem:[%s4 + $0x28] sm:$0xf] %vm1040, %v922
  %1052 = vst.msk [vmem:[%s4 + $0x2c] sm:$0xf] %vm1040, %v923
  %1053 = vst.msk [vmem:[%s4 + $0x30] sm:$0xf] %vm1040, %v924
  %1054 = vst.msk [vmem:[%s4 + $0x34] sm:$0xf] %vm1040, %v925
  %1055 = vst.msk [vmem:[%s4 + $0x38] sm:$0xf] %vm1040, %v926
  %1056 = vst.msk [vmem:[%s4 + $0x3c] sm:$0xf] %vm1040, %v927
  %1057 = vst.msk [vmem:[%s4 + $0x40] sm:$0xf] %vm1040, %v928
  %1058 = vst.msk [vmem:[%s4 + $0x44] sm:$0xf] %vm1040, %v929
  %1059 = vst.msk [vmem:[%s4 + $0x48] sm:$0xf] %vm1040, %v930
  %1060 = vst.msk [vmem:[%s4 + $0x4c] sm:$0xf] %vm1040, %v931
  %1061 = vst.msk [vmem:[%s4 + $0x50] sm:$0xf] %vm1040, %v932
  %1062 = vst.msk [vmem:[%s4 + $0x54] sm:$0xf] %vm1040, %v933
  %1063 = vst.msk [vmem:[%s4 + $0x58] sm:$0xf] %vm1040, %v934
  %1064 = vst.msk [vmem:[%s4 + $0x5c] sm:$0xf] %vm1040, %v935
  %1065 = vst.msk [vmem:[%s4 + $0x60] sm:$0xf] %vm1040, %v936
  %1066 = vst.msk [vmem:[%s4 + $0x64] sm:$0xf] %vm1040, %v937
  %1067 = vst.msk [vmem:[%s4 + $0x68] sm:$0xf] %vm1040, %v938
  %1068 = vst.msk [vmem:[%s4 + $0x6c] sm:$0xf] %vm1040, %v939
  %1069 = vst.msk [vmem:[%s4 + $0x70] sm:$0xf] %vm1040, %v940
  %1070 = vst.msk [vmem:[%s4 + $0x74] sm:$0xf] %vm1040, %v941
  %1071 = vst.msk [vmem:[%s4 + $0x78] sm:$0xf] %vm1040, %v942
  %1072 = vst.msk [vmem:[%s4 + $0x7c] sm:$0xf] %vm1040, %v943
  %1073 = vst.msk [vmem:[%s4 + $0x80] sm:$0xf] %vm1040, %v944
  %1074 = vst.msk [vmem:[%s4 + $0x84] sm:$0xf] %vm1040, %v945
  %1075 = vst.msk [vmem:[%s4 + $0x88] sm:$0xf] %vm1040, %v946
  %1076 = vst.msk [vmem:[%s4 + $0x8c] sm:$0xf] %vm1040, %v947
  %1077 = vst.msk [vmem:[%s4 + $0x90] sm:$0xf] %vm1040, %v948
  %1078 = vst.msk [vmem:[%s4 + $0x94] sm:$0xf] %vm1040, %v949
  %1079 = vst.msk [vmem:[%s4 + $0x98] sm:$0xf] %vm1040, %v950
  %1080 = vst.msk [vmem:[%s4 + $0x9c] sm:$0xf] %vm1040, %v951
  %1081 = vst.msk [vmem:[%s4 + $0xa0] sm:$0xf] %vm1040, %v952
  %1082 = vst.msk [vmem:[%s4 + $0xa4] sm:$0xf] %vm1040, %v953
  %1083 = vst.msk [vmem:[%s4 + $0xa8] sm:$0xf] %vm1040, %v954
  %1084 = vst.msk [vmem:[%s4 + $0xac] sm:$0xf] %vm1040, %v955
  %1085 = vst.msk [vmem:[%s4 + $0xb0] sm:$0xf] %vm1040, %v956
  %1086 = vst.msk [vmem:[%s4 + $0xb4] sm:$0xf] %vm1040, %v957
  %1087 = vst.msk [vmem:[%s4 + $0xb8] sm:$0xf] %vm1040, %v958
  %1088 = vst.msk [vmem:[%s4 + $0xbc] sm:$0xf] %vm1040, %v959
  %1089 = vst.msk [vmem:[%s4 + $0xc0] sm:$0xf] %vm1040, %v960
  %1090 = vst.msk [vmem:[%s4 + $0xc4] sm:$0xf] %vm1040, %v961
  %1091 = vst.msk [vmem:[%s4 + $0xc8] sm:$0xf] %vm1040, %v962
  %1092 = vst.msk [vmem:[%s4 + $0xcc] sm:$0xf] %vm1040, %v963
  %1093 = vst.msk [vmem:[%s4 + $0xd0] sm:$0xf] %vm1040, %v964
  %1094 = vst.msk [vmem:[%s4 + $0xd4] sm:$0xf] %vm1040, %v965
  %1095 = vst.msk [vmem:[%s4 + $0xd8] sm:$0xf] %vm1040, %v966
  %1096 = vst.msk [vmem:[%s4 + $0xdc] sm:$0xf] %vm1040, %v967
  %1097 = vst.msk [vmem:[%s4 + $0xe0] sm:$0xf] %vm1040, %v968
  %1098 = vst.msk [vmem:[%s4 + $0xe4] sm:$0xf] %vm1040, %v969
  %1099 = vst.msk [vmem:[%s4 + $0xe8] sm:$0xf] %vm1040, %v970
  %1100 = vst.msk [vmem:[%s4 + $0xec] sm:$0xf] %vm1040, %v971
  %1101 = vst.msk [vmem:[%s4 + $0xf0] sm:$0xf] %vm1040, %v972
  %1102 = vst.msk [vmem:[%s4 + $0xf4] sm:$0xf] %vm1040, %v973
  %1103 = vst.msk [vmem:[%s4 + $0xf8] sm:$0xf] %vm1040, %v974
  %1104 = vst.msk [vmem:[%s4 + $0xfc] sm:$0xf] %vm1040, %v975
  %v1105 = vld [vmem:[%s5] sm:$0x1]
  %vm1106 = vcmask 31744
  %v1107 = vsel %vm1106, %v530, 0.0
  %v1108 = vsel %vm1106, %v533, 0.0
  %v1109 = vadd.f32 %v1107, %v1108
  %v1110 = vsel %vm1106, %v538, 0.0
  %v1111 = vadd.f32 %v1109, %v1110
  %v1112 = vsel %vm1106, %v541, 0.0
  %v1113 = vadd.f32 %v1111, %v1112
  %v1114 = vsel %vm1106, %v546, 0.0
  %v1115 = vadd.f32 %v1113, %v1114
  %v1116 = vsel %vm1106, %v549, 0.0
  %v1117 = vadd.f32 %v1115, %v1116
  %v1118 = vsel %vm1106, %v554, 0.0
  %v1119 = vadd.f32 %v1117, %v1118
  %v1120 = vsel %vm1106, %v557, 0.0
  %v1121 = vadd.f32 %v1119, %v1120
  %v1122 = vsel %vm1106, %v562, 0.0
  %v1123 = vadd.f32 %v1121, %v1122
  %v1124 = vsel %vm1106, %v565, 0.0
  %v1125 = vadd.f32 %v1123, %v1124
  %v1126 = vsel %vm1106, %v570, 0.0
  %v1127 = vadd.f32 %v1125, %v1126
  %v1128 = vsel %vm1106, %v573, 0.0
  %v1129 = vadd.f32 %v1127, %v1128
  %v1130 = vsel %vm1106, %v578, 0.0
  %v1131 = vadd.f32 %v1129, %v1130
  %v1132 = vsel %vm1106, %v581, 0.0
  %v1133 = vadd.f32 %v1131, %v1132
  %v1134 = vsel %vm1106, %v586, 0.0
  %v1135 = vadd.f32 %v1133, %v1134
  %v1136 = vsel %vm1106, %v589, 0.0
  %v1137 = vadd.f32 %v1135, %v1136
  %v1138 = vsel %vm1106, %v594, 0.0
  %v1139 = vadd.f32 %v1137, %v1138
  %v1140 = vsel %vm1106, %v597, 0.0
  %v1141 = vadd.f32 %v1139, %v1140
  %v1142 = vsel %vm1106, %v602, 0.0
  %v1143 = vadd.f32 %v1141, %v1142
  %v1144 = vsel %vm1106, %v605, 0.0
  %v1145 = vadd.f32 %v1143, %v1144
  %v1146 = vsel %vm1106, %v610, 0.0
  %v1147 = vadd.f32 %v1145, %v1146
  %v1148 = vsel %vm1106, %v613, 0.0
  %v1149 = vadd.f32 %v1147, %v1148
  %v1150 = vsel %vm1106, %v618, 0.0
  %v1151 = vadd.f32 %v1149, %v1150
  %v1152 = vsel %vm1106, %v621, 0.0
  %v1153 = vadd.f32 %v1151, %v1152
  %v1154 = vsel %vm1106, %v626, 0.0
  %v1155 = vadd.f32 %v1153, %v1154
  %v1156 = vsel %vm1106, %v629, 0.0
  %v1157 = vadd.f32 %v1155, %v1156
  %v1158 = vsel %vm1106, %v634, 0.0
  %v1159 = vadd.f32 %v1157, %v1158
  %v1160 = vsel %vm1106, %v637, 0.0
  %v1161 = vadd.f32 %v1159, %v1160
  %v1162 = vsel %vm1106, %v642, 0.0
  %v1163 = vadd.f32 %v1161, %v1162
  %v1164 = vsel %vm1106, %v645, 0.0
  %v1165 = vadd.f32 %v1163, %v1164
  %v1166 = vsel %vm1106, %v650, 0.0
  %v1167 = vadd.f32 %v1165, %v1166
  %v1168 = vsel %vm1106, %v653, 0.0
  %v1169 = vadd.f32 %v1167, %v1168
  %v1170 = vsel %vm1106, %v658, 0.0
  %v1171 = vadd.f32 %v1169, %v1170
  %v1172 = vsel %vm1106, %v661, 0.0
  %v1173 = vadd.f32 %v1171, %v1172
  %v1174 = vsel %vm1106, %v666, 0.0
  %v1175 = vadd.f32 %v1173, %v1174
  %v1176 = vsel %vm1106, %v669, 0.0
  %v1177 = vadd.f32 %v1175, %v1176
  %v1178 = vsel %vm1106, %v674, 0.0
  %v1179 = vadd.f32 %v1177, %v1178
  %v1180 = vsel %vm1106, %v677, 0.0
  %v1181 = vadd.f32 %v1179, %v1180
  %v1182 = vsel %vm1106, %v682, 0.0
  %v1183 = vadd.f32 %v1181, %v1182
  %v1184 = vsel %vm1106, %v685, 0.0
  %v1185 = vadd.f32 %v1183, %v1184
  %v1186 = vsel %vm1106, %v690, 0.0
  %v1187 = vadd.f32 %v1185, %v1186
  %v1188 = vsel %vm1106, %v693, 0.0
  %v1189 = vadd.f32 %v1187, %v1188
  %v1190 = vsel %vm1106, %v698, 0.0
  %v1191 = vadd.f32 %v1189, %v1190
  %v1192 = vsel %vm1106, %v701, 0.0
  %v1193 = vadd.f32 %v1191, %v1192
  %v1194 = vsel %vm1106, %v706, 0.0
  %v1195 = vadd.f32 %v1193, %v1194
  %v1196 = vsel %vm1106, %v709, 0.0
  %v1197 = vadd.f32 %v1195, %v1196
  %v1198 = vsel %vm1106, %v714, 0.0
  %v1199 = vadd.f32 %v1197, %v1198
  %v1200 = vsel %vm1106, %v717, 0.0
  %v1201 = vadd.f32 %v1199, %v1200
  %v1202 = vsel %vm1106, %v722, 0.0
  %v1203 = vadd.f32 %v1201, %v1202
  %v1204 = vsel %vm1106, %v725, 0.0
  %v1205 = vadd.f32 %v1203, %v1204
  %v1206 = vsel %vm1106, %v730, 0.0
  %v1207 = vadd.f32 %v1205, %v1206
  %v1208 = vsel %vm1106, %v733, 0.0
  %v1209 = vadd.f32 %v1207, %v1208
  %v1210 = vsel %vm1106, %v738, 0.0
  %v1211 = vadd.f32 %v1209, %v1210
  %v1212 = vsel %vm1106, %v741, 0.0
  %v1213 = vadd.f32 %v1211, %v1212
  %v1214 = vsel %vm1106, %v746, 0.0
  %v1215 = vadd.f32 %v1213, %v1214
  %v1216 = vsel %vm1106, %v749, 0.0
  %v1217 = vadd.f32 %v1215, %v1216
  %v1218 = vsel %vm1106, %v754, 0.0
  %v1219 = vadd.f32 %v1217, %v1218
  %v1220 = vsel %vm1106, %v757, 0.0
  %v1221 = vadd.f32 %v1219, %v1220
  %v1222 = vsel %vm1106, %v762, 0.0
  %v1223 = vadd.f32 %v1221, %v1222
  %v1224 = vsel %vm1106, %v765, 0.0
  %v1225 = vadd.f32 %v1223, %v1224
  %v1226 = vsel %vm1106, %v770, 0.0
  %v1227 = vadd.f32 %v1225, %v1226
  %v1228 = vsel %vm1106, %v773, 0.0
  %v1229 = vadd.f32 %v1227, %v1228
  %v1230 = vsel %vm1106, %v778, 0.0
  %v1231 = vadd.f32 %v1229, %v1230
  %v1232 = vsel %vm1106, %v781, 0.0
  %v1233 = vadd.f32 %v1231, %v1232
  %v1234 = vrot.slane %v1233, 4
  %v1235 = vadd.f32 %v1233, %v1234
  %v1236 = vrot.slane %v1235, 2
  %v1237 = vadd.f32 %v1235, %v1236
  %v1238 = vrot.slane %v1237, 1
  %v1239 = vadd.f32 %v1237, %v1238
  %v1240 = vadd.f32 %v1105, %v1239
  %vm1241 = vcmask 24576
  %1242 = vst.msk [vmem:[%s5] sm:$0x1] %vm1241, %v1240
  %v1243 = vld [vmem:[%s5 + $0x8] sm:$0x1]
  %v1244 = vmul.f32 %v530, %v530
  %v1245 = vmul.f32 %v533, %v533
  %v1246 = vmul.f32 %v538, %v538
  %v1247 = vmul.f32 %v541, %v541
  %v1248 = vmul.f32 %v546, %v546
  %v1249 = vmul.f32 %v549, %v549
  %v1250 = vmul.f32 %v554, %v554
  %v1251 = vmul.f32 %v557, %v557
  %v1252 = vmul.f32 %v562, %v562
  %v1253 = vmul.f32 %v565, %v565
  %v1254 = vmul.f32 %v570, %v570
  %v1255 = vmul.f32 %v573, %v573
  %v1256 = vmul.f32 %v578, %v578
  %v1257 = vmul.f32 %v581, %v581
  %v1258 = vmul.f32 %v586, %v586
  %v1259 = vmul.f32 %v589, %v589
  %v1260 = vmul.f32 %v594, %v594
  %v1261 = vmul.f32 %v597, %v597
  %v1262 = vmul.f32 %v602, %v602
  %v1263 = vmul.f32 %v605, %v605
  %v1264 = vmul.f32 %v610, %v610
  %v1265 = vmul.f32 %v613, %v613
  %v1266 = vmul.f32 %v618, %v618
  %v1267 = vmul.f32 %v621, %v621
  %v1268 = vmul.f32 %v626, %v626
  %v1269 = vmul.f32 %v629, %v629
  %v1270 = vmul.f32 %v634, %v634
  %v1271 = vmul.f32 %v637, %v637
  %v1272 = vmul.f32 %v642, %v642
  %v1273 = vmul.f32 %v645, %v645
  %v1274 = vmul.f32 %v650, %v650
  %v1275 = vmul.f32 %v653, %v653
  %v1276 = vmul.f32 %v658, %v658
  %v1277 = vmul.f32 %v661, %v661
  %v1278 = vmul.f32 %v666, %v666
  %v1279 = vmul.f32 %v669, %v669
  %v1280 = vmul.f32 %v674, %v674
  %v1281 = vmul.f32 %v677, %v677
  %v1282 = vmul.f32 %v682, %v682
  %v1283 = vmul.f32 %v685, %v685
  %v1284 = vmul.f32 %v690, %v690
  %v1285 = vmul.f32 %v693, %v693
  %v1286 = vmul.f32 %v698, %v698
  %v1287 = vmul.f32 %v701, %v701
  %v1288 = vmul.f32 %v706, %v706
  %v1289 = vmul.f32 %v709, %v709
  %v1290 = vmul.f32 %v714, %v714
  %v1291 = vmul.f32 %v717, %v717
  %v1292 = vmul.f32 %v722, %v722
  %v1293 = vmul.f32 %v725, %v725
  %v1294 = vmul.f32 %v730, %v730
  %v1295 = vmul.f32 %v733, %v733
  %v1296 = vmul.f32 %v738, %v738
  %v1297 = vmul.f32 %v741, %v741
  %v1298 = vmul.f32 %v746, %v746
  %v1299 = vmul.f32 %v749, %v749
  %v1300 = vmul.f32 %v754, %v754
  %v1301 = vmul.f32 %v757, %v757
  %v1302 = vmul.f32 %v762, %v762
  %v1303 = vmul.f32 %v765, %v765
  %v1304 = vmul.f32 %v770, %v770
  %v1305 = vmul.f32 %v773, %v773
  %v1306 = vmul.f32 %v778, %v778
  %v1307 = vmul.f32 %v781, %v781
  %v1308 = vsel %vm1106, %v1244, 0.0
  %v1309 = vsel %vm1106, %v1245, 0.0
  %v1310 = vadd.f32 %v1308, %v1309
  %v1311 = vsel %vm1106, %v1246, 0.0
  %v1312 = vadd.f32 %v1310, %v1311
  %v1313 = vsel %vm1106, %v1247, 0.0
  %v1314 = vadd.f32 %v1312, %v1313
  %v1315 = vsel %vm1106, %v1248, 0.0
  %v1316 = vadd.f32 %v1314, %v1315
  %v1317 = vsel %vm1106, %v1249, 0.0
  %v1318 = vadd.f32 %v1316, %v1317
  %v1319 = vsel %vm1106, %v1250, 0.0
  %v1320 = vadd.f32 %v1318, %v1319
  %v1321 = vsel %vm1106, %v1251, 0.0
  %v1322 = vadd.f32 %v1320, %v1321
  %v1323 = vsel %vm1106, %v1252, 0.0
  %v1324 = vadd.f32 %v1322, %v1323
  %v1325 = vsel %vm1106, %v1253, 0.0
  %v1326 = vadd.f32 %v1324, %v1325
  %v1327 = vsel %vm1106, %v1254, 0.0
  %v1328 = vadd.f32 %v1326, %v1327
  %v1329 = vsel %vm1106, %v1255, 0.0
  %v1330 = vadd.f32 %v1328, %v1329
  %v1331 = vsel %vm1106, %v1256, 0.0
  %v1332 = vadd.f32 %v1330, %v1331
  %v1333 = vsel %vm1106, %v1257, 0.0
  %v1334 = vadd.f32 %v1332, %v1333
  %v1335 = vsel %vm1106, %v1258, 0.0
  %v1336 = vadd.f32 %v1334, %v1335
  %v1337 = vsel %vm1106, %v1259, 0.0
  %v1338 = vadd.f32 %v1336, %v1337
  %v1339 = vsel %vm1106, %v1260, 0.0
  %v1340 = vadd.f32 %v1338, %v1339
  %v1341 = vsel %vm1106, %v1261, 0.0
  %v1342 = vadd.f32 %v1340, %v1341
  %v1343 = vsel %vm1106, %v1262, 0.0
  %v1344 = vadd.f32 %v1342, %v1343
  %v1345 = vsel %vm1106, %v1263, 0.0
  %v1346 = vadd.f32 %v1344, %v1345
  %v1347 = vsel %vm1106, %v1264, 0.0
  %v1348 = vadd.f32 %v1346, %v1347
  %v1349 = vsel %vm1106, %v1265, 0.0
  %v1350 = vadd.f32 %v1348, %v1349
  %v1351 = vsel %vm1106, %v1266, 0.0
  %v1352 = vadd.f32 %v1350, %v1351
  %v1353 = vsel %vm1106, %v1267, 0.0
  %v1354 = vadd.f32 %v1352, %v1353
  %v1355 = vsel %vm1106, %v1268, 0.0
  %v1356 = vadd.f32 %v1354, %v1355
  %v1357 = vsel %vm1106, %v1269, 0.0
  %v1358 = vadd.f32 %v1356, %v1357
  %v1359 = vsel %vm1106, %v1270, 0.0
  %v1360 = vadd.f32 %v1358, %v1359
  %v1361 = vsel %vm1106, %v1271, 0.0
  %v1362 = vadd.f32 %v1360, %v1361
  %v1363 = vsel %vm1106, %v1272, 0.0
  %v1364 = vadd.f32 %v1362, %v1363
  %v1365 = vsel %vm1106, %v1273, 0.0
  %v1366 = vadd.f32 %v1364, %v1365
  %v1367 = vsel %vm1106, %v1274, 0.0
  %v1368 = vadd.f32 %v1366, %v1367
  %v1369 = vsel %vm1106, %v1275, 0.0
  %v1370 = vadd.f32 %v1368, %v1369
  %v1371 = vsel %vm1106, %v1276, 0.0
  %v1372 = vadd.f32 %v1370, %v1371
  %v1373 = vsel %vm1106, %v1277, 0.0
  %v1374 = vadd.f32 %v1372, %v1373
  %v1375 = vsel %vm1106, %v1278, 0.0
  %v1376 = vadd.f32 %v1374, %v1375
  %v1377 = vsel %vm1106, %v1279, 0.0
  %v1378 = vadd.f32 %v1376, %v1377
  %v1379 = vsel %vm1106, %v1280, 0.0
  %v1380 = vadd.f32 %v1378, %v1379
  %v1381 = vsel %vm1106, %v1281, 0.0
  %v1382 = vadd.f32 %v1380, %v1381
  %v1383 = vsel %vm1106, %v1282, 0.0
  %v1384 = vadd.f32 %v1382, %v1383
  %v1385 = vsel %vm1106, %v1283, 0.0
  %v1386 = vadd.f32 %v1384, %v1385
  %v1387 = vsel %vm1106, %v1284, 0.0
  %v1388 = vadd.f32 %v1386, %v1387
  %v1389 = vsel %vm1106, %v1285, 0.0
  %v1390 = vadd.f32 %v1388, %v1389
  %v1391 = vsel %vm1106, %v1286, 0.0
  %v1392 = vadd.f32 %v1390, %v1391
  %v1393 = vsel %vm1106, %v1287, 0.0
  %v1394 = vadd.f32 %v1392, %v1393
  %v1395 = vsel %vm1106, %v1288, 0.0
  %v1396 = vadd.f32 %v1394, %v1395
  %v1397 = vsel %vm1106, %v1289, 0.0
  %v1398 = vadd.f32 %v1396, %v1397
  %v1399 = vsel %vm1106, %v1290, 0.0
  %v1400 = vadd.f32 %v1398, %v1399
  %v1401 = vsel %vm1106, %v1291, 0.0
  %v1402 = vadd.f32 %v1400, %v1401
  %v1403 = vsel %vm1106, %v1292, 0.0
  %v1404 = vadd.f32 %v1402, %v1403
  %v1405 = vsel %vm1106, %v1293, 0.0
  %v1406 = vadd.f32 %v1404, %v1405
  %v1407 = vsel %vm1106, %v1294, 0.0
  %v1408 = vadd.f32 %v1406, %v1407
  %v1409 = vsel %vm1106, %v1295, 0.0
  %v1410 = vadd.f32 %v1408, %v1409
  %v1411 = vsel %vm1106, %v1296, 0.0
  %v1412 = vadd.f32 %v1410, %v1411
  %v1413 = vsel %vm1106, %v1297, 0.0
  %v1414 = vadd.f32 %v1412, %v1413
  %v1415 = vsel %vm1106, %v1298, 0.0
  %v1416 = vadd.f32 %v1414, %v1415
  %v1417 = vsel %vm1106, %v1299, 0.0
  %v1418 = vadd.f32 %v1416, %v1417
  %v1419 = vsel %vm1106, %v1300, 0.0
  %v1420 = vadd.f32 %v1418, %v1419
  %v1421 = vsel %vm1106, %v1301, 0.0
  %v1422 = vadd.f32 %v1420, %v1421
  %v1423 = vsel %vm1106, %v1302, 0.0
  %v1424 = vadd.f32 %v1422, %v1423
  %v1425 = vsel %vm1106, %v1303, 0.0
  %v1426 = vadd.f32 %v1424, %v1425
  %v1427 = vsel %vm1106, %v1304, 0.0
  %v1428 = vadd.f32 %v1426, %v1427
  %v1429 = vsel %vm1106, %v1305, 0.0
  %v1430 = vadd.f32 %v1428, %v1429
  %v1431 = vsel %vm1106, %v1306, 0.0
  %v1432 = vadd.f32 %v1430, %v1431
  %v1433 = vsel %vm1106, %v1307, 0.0
  %v1434 = vadd.f32 %v1432, %v1433
  %v1435 = vrot.slane %v1434, 4
  %v1436 = vadd.f32 %v1434, %v1435
  %v1437 = vrot.slane %v1436, 2
  %v1438 = vadd.f32 %v1436, %v1437
  %v1439 = vrot.slane %v1438, 1
  %v1440 = vadd.f32 %v1438, %v1439
  %v1441 = vadd.f32 %v1243, %v1440
  %1442 = vst.msk [vmem:[%s5 + $0x8] sm:$0x1] %vm1241, %v1441
  // Predicated region
  $region22: #{tpu_custom_call.1} parent=0 // pred_check
    _
  $region23: #{tpu_custom_call.1} parent=0 // pred_check_branch
    %1444 = sbr.rel (0) target = $region25
  $region24: #{tpu_custom_call.1} parent=0 // pred_region
    _
  $region25: #{tpu_custom_call.1} parent=0 // pred_fallthru
    _
  // Predicated region
  $region26: #{tpu_custom_call.1} parent=0 // pred_check
    _
  $region27: #{tpu_custom_call.1} parent=0 // pred_check_branch
    %1446 = sbr.rel (0) target = $region29
  $region28: #{tpu_custom_call.1} parent=0 // pred_region
    _
  $region29: #{tpu_custom_call.1} parent=0 // pred_fallthru
    _
  // Predicated region
  $region30: #{tpu_custom_call.1} parent=0 // pred_check
    _
  $region31: #{tpu_custom_call.1} parent=0 // pred_check_branch
    %1448 = sbr.rel (0) target = $region33
  $region32: #{tpu_custom_call.1} parent=0 // pred_region
    _
  $region33: #{tpu_custom_call.1} parent=0 // pred_fallthru
    _
  // Predicated region
  $region34: #{tpu_custom_call.1} parent=0 // pred_check
    _
  $region35: #{tpu_custom_call.1} parent=0 // pred_check_branch
    %1450 = sbr.rel (0) target = $region37
  $region36: #{tpu_custom_call.1} parent=0 // pred_region
    _
  $region37: #{tpu_custom_call.1} parent=0 // pred_fallthru
    _

</llo_original>
